<compile_context>
chip_gen: v6e
topology: v6e:2x2x1
jax: 0.10.0
libtpu: 0.0.40
codegen_flags: <defaults>
</compile_context>

<pallas_src>
import functools
import math

import jax
import jax.numpy as jnp
from jax import lax
from jax.experimental import pallas as pl
from jax.experimental.pallas import tpu as pltpu


def _layernorm(v, w, b, eps=1e-5):
    mu = jnp.mean(v, axis=-1, keepdims=True)
    var = jnp.mean((v - mu) ** 2, axis=-1, keepdims=True)
    return (v - mu) * lax.rsqrt(var + eps) * w + b


# ---------------------------------------------------------------------------
# Kernel 1: x1 = x + c_proj(causal_attention(c_attn(ln_1(x))))
# grid = (B, n_q_tiles, n_kv_tiles); kv axis is the online-softmax reduction.
# ---------------------------------------------------------------------------
def attn_kernel(xq_ref, xkv_ref, ln1w_ref, ln1b_ref, wqkv_ref, bqkv_ref,
                wproj_ref, bproj_ref, out_ref,
                q_scr, m_scr, l_scr, acc_scr, *, n_head):
    block_q, C = xq_ref.shape
    block_kv = xkv_ref.shape[0]
    hd = C // n_head
    scale = 1.0 / math.sqrt(hd)

    qi = pl.program_id(1)
    ki = pl.program_id(2)
    nk = pl.num_programs(2)

    # ---- new query tile: compute q once (bf16), reset online-softmax state ----
    @pl.when(ki == 0)
    def _():
        hq = _layernorm(xq_ref[...], ln1w_ref[...], ln1b_ref[...])
        q2 = jnp.dot(hq.astype(jnp.bfloat16), wqkv_ref[:, 0:C],
                     preferred_element_type=jnp.float32) + bqkv_ref[:, 0:C]
        q2 = q2 * scale
        # head-major layout (n_head, block_q, hd) -- layout plumbing only,
        # the matmuls below are a single head-batched contraction.
        q_scr[...] = jnp.stack(
            [q2[:, h * hd:(h + 1) * hd] for h in range(n_head)],
            axis=0).astype(jnp.bfloat16)
        m_scr[...] = jnp.full(m_scr.shape, -jnp.inf, dtype=m_scr.dtype)
        l_scr[...] = jnp.zeros(l_scr.shape, dtype=l_scr.dtype)
        acc_scr[...] = jnp.zeros(acc_scr.shape, dtype=acc_scr.dtype)

    # ---- skip kv tiles that lie entirely above the causal diagonal ----
    @pl.when(ki <= qi)          # tiles are square (block_kv == block_q)
    def _():
        hkv = _layernorm(xkv_ref[...], ln1w_ref[...], ln1b_ref[...])
        kv2 = jnp.dot(hkv.astype(jnp.bfloat16), wqkv_ref[:, C:3 * C],
                      preferred_element_type=jnp.float32) + bqkv_ref[:, C:3 * C]
        k = jnp.stack([kv2[:, h * hd:(h + 1) * hd] for h in range(n_head)],
                      axis=0).astype(jnp.bfloat16)          # (n_head, bkv, hd)
        v = jnp.stack([kv2[:, C + h * hd:C + (h + 1) * hd] for h in range(n_head)],
                      axis=0).astype(jnp.bfloat16)          # (n_head, bkv, hd)

        # one head-batched MXU contraction: (n_head, bq, bkv)
        s = jnp.einsum('hqd,hkd->hqk', q_scr[...], k,
                       preferred_element_type=jnp.float32)
        q_pos = qi * block_q + lax.broadcasted_iota(jnp.int32, (block_q, block_kv), 0)
        k_pos = ki * block_kv + lax.broadcasted_iota(jnp.int32, (block_q, block_kv), 1)
        s = jnp.where((k_pos <= q_pos)[None], s, -1e30)

        m_prev = m_scr[...]
        m_new = jnp.maximum(m_prev, jnp.max(s, axis=-1, keepdims=True))
        alpha = jnp.exp(m_prev - m_new)
        p = jnp.exp(s - m_new)
        l_scr[...] = alpha * l_scr[...] + jnp.sum(p, axis=-1, keepdims=True)
        acc_scr[...] = alpha * acc_scr[...] + jnp.einsum(
            'hqk,hkd->hqd', p.astype(jnp.bfloat16), v,
            preferred_element_type=jnp.float32)
        m_scr[...] = m_new

    # ---- finalize: normalize, merge heads, output projection, residual ----
    @pl.when(ki == nk - 1)
    def _():
        inv_l = pl.reciprocal(l_scr[...], approx=True)       # (n_head, bq, 1)
        o = acc_scr[...] * inv_l                             # (n_head, bq, hd)
        y = jnp.concatenate([o[h] for h in range(n_head)], axis=-1)   # (bq, C)
        y = jnp.dot(y.astype(jnp.bfloat16), wproj_ref[...],
                    preferred_element_type=jnp.float32) + bproj_ref[...]
        out_ref[...] = xq_ref[...] + y


# ---------------------------------------------------------------------------
# Kernel 2: out = x1 + c_proj(gelu(c_fc(ln_2(x1))))
# grid = (B, n_t_tiles, n_h_tiles); the hidden dim H=4C is the reduction axis.
# ---------------------------------------------------------------------------
def mlp_kernel(x1_ref, ln2w_ref, ln2b_ref, wfc_ref, bfc_ref, wfc2_ref, bfc2_ref,
               out_ref, hn_scr, acc_scr):
    hi = pl.program_id(2)
    nh = pl.num_programs(2)

    @pl.when(hi == 0)
    def _():
        h = _layernorm(x1_ref[...], ln2w_ref[...], ln2b_ref[...])
        hn_scr[...] = h.astype(jnp.bfloat16)
        acc_scr[...] = jnp.zeros(acc_scr.shape, dtype=acc_scr.dtype)

    t = jnp.dot(hn_scr[...], wfc_ref[...],
                preferred_element_type=jnp.float32) + bfc_ref[...]
    t = jax.nn.gelu(t, approximate=False)     # nn.GELU() default = exact erf
    acc_scr[...] += jnp.dot(t.astype(jnp.bfloat16), wfc2_ref[...],
                            preferred_element_type=jnp.float32)

    @pl.when(hi == nh - 1)
    def _():
        out_ref[...] = x1_ref[...] + acc_scr[...] + bfc2_ref[...]


def _vmem_limit(working_set_bytes):
    # double-buffered pipeline + headroom, clamped to a portable ceiling.
    return int(min(max(2 * working_set_bytes + (8 << 20), 32 << 20), 96 << 20))


def _const_spec(shape):
    return pl.BlockSpec(shape, lambda b, i, j: (0,) * len(shape))


def block_forward(x, params, *, n_head, block_q=None, block_h=None):
    """x: (B, T, C) float32. params: dict of (in, out)-layout weights (f32)."""
    B, T, C = x.shape
    assert C % n_head == 0
    hd = C // n_head
    H = 4 * C

    if block_q is None:
        block_q = T if T <= 128 else 128
    if block_h is None:
        block_h = H if H <= 512 else 512
    assert T % block_q == 0 and (block_q % 8 == 0 or block_q == T)
    assert H % block_h == 0 and (block_h % 128 == 0 or block_h == H)
    n_q = T // block_q
    n_h = H // block_h

    # bf16 weights for the MXU; biases / LN params stay f32.
    w_qkv = params["w_qkv"].astype(jnp.bfloat16)
    w_proj = params["w_proj"].astype(jnp.bfloat16)
    w_fc = params["w_fc"].astype(jnp.bfloat16)
    w_fc2 = params["w_fc2"].astype(jnp.bfloat16)

    # per-step working-set estimates (bytes) for vmem_limit_bytes
    attn_ws = ((w_qkv.size + w_proj.size) * 2
               + (params["b_qkv"].size + params["b_proj"].size
                  + params["ln1_w"].size + params["ln1_b"].size) * 4
               + 3 * block_q * C * 4                      # xq / xkv / out tiles
               + block_q * C * (2 + 4)                    # q + acc scratch
               + 2 * n_head * block_q * 4)                # m, l scratch
    mlp_ws = ((C * block_h + block_h * C) * 2 + block_h * 4
              + (params["ln2_w"].size + params["ln2_b"].size
                 + params["b_fc2"].size) * 4
              + 2 * block_q * C * 4                       # x1 / out tiles
              + block_q * C * (2 + 4))                    # hn + acc scratch

    # ---- kernel 1: attention block ----
    x1 = pl.pallas_call(
        functools.partial(attn_kernel, n_head=n_head),
        out_shape=jax.ShapeDtypeStruct((B, T, C), jnp.float32),
        grid_spec=pltpu.PrefetchScalarGridSpec(
            num_scalar_prefetch=0,
            grid=(B, n_q, n_q),
            in_specs=[
                pl.BlockSpec((None, block_q, C), lambda b, qi, ki: (b, qi, 0)),  # x (q rows)
                pl.BlockSpec((None, block_q, C), lambda b, qi, ki: (b, ki, 0)),  # x (kv rows)
                _const_spec((1, C)),          # ln1 w
                _const_spec((1, C)),          # ln1 b
                _const_spec((C, 3 * C)),      # W_qkv (bf16)
                _const_spec((1, 3 * C)),      # b_qkv
                _const_spec((C, C)),          # W_proj (bf16)
                _const_spec((1, C)),          # b_proj
            ],
            out_specs=pl.BlockSpec((None, block_q, C), lambda b, qi, ki: (b, qi, 0)),
            scratch_shapes=[
                pltpu.VMEM((n_head, block_q, hd), jnp.bfloat16),   # q
                pltpu.VMEM((n_head, block_q, 1), jnp.float32),     # running max
                pltpu.VMEM((n_head, block_q, 1), jnp.float32),     # running sum
                pltpu.VMEM((n_head, block_q, hd), jnp.float32),    # accumulator
            ]),
        compiler_params=pltpu.CompilerParams(
            dimension_semantics=("parallel", "parallel", "arbitrary"),
            vmem_limit_bytes=_vmem_limit(attn_ws)),
    )(x, x,
      params["ln1_w"], params["ln1_b"],
      w_qkv, params["b_qkv"],
      w_proj, params["b_proj"])

    # ---- kernel 2: MLP block ----
    out = pl.pallas_call(
        mlp_kernel,
        out_shape=jax.ShapeDtypeStruct((B, T, C), jnp.float32),
        grid_spec=pltpu.PrefetchScalarGridSpec(
            num_scalar_prefetch=0,
            grid=(B, n_q, n_h),
            in_specs=[
                pl.BlockSpec((None, block_q, C), lambda b, ti, hi: (b, ti, 0)),  # x1
                _const_spec((1, C)),                                             # ln2 w
                _const_spec((1, C)),                                             # ln2 b
                pl.BlockSpec((C, block_h), lambda b, ti, hi: (0, hi)),           # W_fc blk
                pl.BlockSpec((1, block_h), lambda b, ti, hi: (0, hi)),           # b_fc blk
                pl.BlockSpec((block_h, C), lambda b, ti, hi: (hi, 0)),           # W_fc2 blk
                _const_spec((1, C)),                                             # b_fc2
            ],
            out_specs=pl.BlockSpec((None, block_q, C), lambda b, ti, hi: (b, ti, 0)),
            scratch_shapes=[
                pltpu.VMEM((block_q, C), jnp.bfloat16),   # ln2(x1) cache
                pltpu.VMEM((block_q, C), jnp.float32),    # accumulator
            ]),
        compiler_params=pltpu.CompilerParams(
            dimension_semantics=("parallel", "parallel", "arbitrary"),
            vmem_limit_bytes=_vmem_limit(mlp_ws)),
    )(x1,
      params["ln2_w"], params["ln2_b"],
      w_fc, params["b_fc"],
      w_fc2, params["b_fc2"])

    return out


def block_reference(x, params, *, n_head):
    """Pure-JAX f32 reference mirroring the PyTorch forward (eval mode)."""
    B, T, C = x.shape
    hd = C // n_head

    h = _layernorm(x, params["ln1_w"], params["ln1_b"])
    qkv = h @ params["w_qkv"] + params["b_qkv"]
    q, k, v = jnp.split(qkv, 3, axis=-1)
    q = q.reshape(B, T, n_head, hd).transpose(0, 2, 1, 3)
    k = k.reshape(B, T, n_head, hd).transpose(0, 2, 1, 3)
    v = v.reshape(B, T, n_head, hd).transpose(0, 2, 1, 3)
    att = jnp.einsum("bhqd,bhkd->bhqk", q, k) / math.sqrt(hd)
    causal = jnp.tril(jnp.ones((T, T), dtype=bool))
    att = jnp.where(causal[None, None], att, -jnp.inf)
    att = jax.nn.softmax(att, axis=-1)
    y = jnp.einsum("bhqk,bhkd->bhqd", att, v)
    y = y.transpose(0, 2, 1, 3).reshape(B, T, C)
    y = y @ params["w_proj"] + params["b_proj"]
    x1 = x + y

    h2 = _layernorm(x1, params["ln2_w"], params["ln2_b"])
    h2 = h2 @ params["w_fc"] + params["b_fc"]
    h2 = jax.nn.gelu(h2, approximate=False)
    h2 = h2 @ params["w_fc2"] + params["b_fc2"]
    return x1 + h2


def init_params(key, n_embd):
    C, H = n_embd, 4 * n_embd
    ks = jax.random.split(key, 8)

    def lin(k, fan_in, fan_out):
        # (in, out) layout == PyTorch Linear weight transposed
        return jax.random.normal(k, (fan_in, fan_out), jnp.float32) * (1.0 / math.sqrt(fan_in))

    return {
        "ln1_w": jnp.ones((1, C), jnp.float32),
        "ln1_b": jnp.zeros((1, C), jnp.float32),
        "w_qkv": lin(ks[0], C, 3 * C),
        "b_qkv": jax.random.normal(ks[1], (1, 3 * C), jnp.float32) * 0.02,
        "w_proj": lin(ks[2], C, C),
        "b_proj": jax.random.normal(ks[3], (1, C), jnp.float32) * 0.02,
        "ln2_w": jnp.ones((1, C), jnp.float32),
        "ln2_b": jnp.zeros((1, C), jnp.float32),
        "w_fc": lin(ks[4], C, H),
        "b_fc": jax.random.normal(ks[5], (1, H), jnp.float32) * 0.02,
        "w_fc2": lin(ks[6], H, C),
        "b_fc2": jax.random.normal(ks[7], (1, C), jnp.float32) * 0.02,
    }


if __name__ == "__main__":
    # Small demo shapes; real workloads should use C a multiple of 128 and
    # larger T tiles (lane-dense output stores, fuller MXU contractions).
    B, T, C, n_head = 2, 16, 64, 4        # head_dim = 16, H = 256

    key = jax.random.PRNGKey(0)
    kx, kp = jax.random.split(key)
    x = jax.random.normal(kx, (B, T, C), jnp.float32)
    params = init_params(kp, C)

    # block_q=8 / block_h=128 exercise the q/kv tiling, the causal-tile skip
    # and the H-reduction grid even at these tiny shapes.
    out = block_forward(x, params, n_head=n_head, block_q=8, block_h=128)
    out = jax.block_until_ready(out)

    ref = block_reference(x, params, n_head=n_head)
    assert out.shape == (B, T, C)
    # bf16 MXU operands + approx reciprocal => relaxed tolerance vs f32 reference
    assert jnp.allclose(out, ref, atol=1e-1, rtol=1e-1), \
        f"mismatch vs reference: max abs err {jnp.max(jnp.abs(out - ref))}"

    print("KERNEL_OK")
</pallas_src>

<mosaic_0001>
module attributes {stable_mosaic.version = 11 : i64} {
  func.func @attn_kernel(%arg0: i32, %arg1: i32, %arg2: i32, %arg3: memref<1x8x64xf32, #tpu.memory_space<vmem>>, %arg4: memref<1x8x64xf32, #tpu.memory_space<vmem>>, %arg5: memref<1x64xf32, #tpu.memory_space<vmem>>, %arg6: memref<1x64xf32, #tpu.memory_space<vmem>>, %arg7: memref<64x192xbf16, #tpu.memory_space<vmem>>, %arg8: memref<1x192xf32, #tpu.memory_space<vmem>>, %arg9: memref<64x64xbf16, #tpu.memory_space<vmem>>, %arg10: memref<1x64xf32, #tpu.memory_space<vmem>>, %arg11: memref<1x8x64xf32, #tpu.memory_space<vmem>>, %arg12: memref<4x8x16xbf16, #tpu.memory_space<vmem>>, %arg13: memref<4x8x1xf32, #tpu.memory_space<vmem>>, %arg14: memref<4x8x1xf32, #tpu.memory_space<vmem>>, %arg15: memref<4x8x16xf32, #tpu.memory_space<vmem>>) attributes {dimension_semantics = [#tpu.dimension_semantics<parallel>, #tpu.dimension_semantics<parallel>, #tpu.dimension_semantics<arbitrary>], iteration_bounds = array<i64: 2, 2, 2>, scalar_prefetch = 0 : i64, scratch_operands = 4 : i64, tpu.core_type = #tpu.core_type<tc>, window_params = [{transform_indices = @transform_0, window_bounds = array<i64: 1, 8, 64>}, {transform_indices = @transform_1, window_bounds = array<i64: 1, 8, 64>}, {pipeline_mode = #tpu.pipeline_mode<synchronous>, transform_indices = @transform_2, window_bounds = array<i64: 1, 64>}, {pipeline_mode = #tpu.pipeline_mode<synchronous>, transform_indices = @transform_3, window_bounds = array<i64: 1, 64>}, {pipeline_mode = #tpu.pipeline_mode<synchronous>, transform_indices = @transform_4, window_bounds = array<i64: 64, 192>}, {pipeline_mode = #tpu.pipeline_mode<synchronous>, transform_indices = @transform_5, window_bounds = array<i64: 1, 192>}, {pipeline_mode = #tpu.pipeline_mode<synchronous>, transform_indices = @transform_6, window_bounds = array<i64: 64, 64>}, {pipeline_mode = #tpu.pipeline_mode<synchronous>, transform_indices = @transform_7, window_bounds = array<i64: 1, 64>}, {transform_indices = @transform_8, window_bounds = array<i64: 1, 8, 64>}]} {
    %c0_i32 = arith.constant 0 : i32
    %0 = arith.cmpi eq, %arg2, %c0_i32 : i32
    %1 = arith.extui %0 : i1 to i32
    %c0_i32_0 = arith.constant 0 : i32
    %2 = arith.cmpi ne, %1, %c0_i32_0 : i32
    scf.if %2 {
      %c0 = arith.constant 0 : index
      %c0_3 = arith.constant 0 : index
      %c0_4 = arith.constant 0 : index
      %9 = vector.load %arg3[%c0, %c0_3, %c0_4] : memref<1x8x64xf32, #tpu.memory_space<vmem>>, vector<1x8x64xf32>
      %10 = vector.shape_cast %9 : vector<1x8x64xf32> to vector<8x64xf32>
      %c0_5 = arith.constant 0 : index
      %c0_6 = arith.constant 0 : index
      %11 = vector.load %arg5[%c0_5, %c0_6] : memref<1x64xf32, #tpu.memory_space<vmem>>, vector<1x64xf32>
      %c0_7 = arith.constant 0 : index
      %c0_8 = arith.constant 0 : index
      %12 = vector.load %arg6[%c0_7, %c0_8] : memref<1x64xf32, #tpu.memory_space<vmem>>, vector<1x64xf32>
      %cst = arith.constant dense<0.000000e+00> : vector<8xf32>
      %13 = vector.multi_reduction <add>, %10, %cst [1] : vector<8x64xf32> to vector<8xf32>
      %14 = vector.shape_cast %13 : vector<8xf32> to vector<8x1xf32>
      %cst_9 = arith.constant 6.400000e+01 : f32
      %15 = vector.broadcast %cst_9 : f32 to vector<8x1xf32>
      %16 = arith.divf %14, %15 : vector<8x1xf32>
      %17 = vector.broadcast %16 : vector<8x1xf32> to vector<8x64xf32>
      %18 = arith.subf %10, %17 : vector<8x64xf32>
      %19 = arith.mulf %18, %18 : vector<8x64xf32>
      %cst_10 = arith.constant dense<0.000000e+00> : vector<8xf32>
      %20 = vector.multi_reduction <add>, %19, %cst_10 [1] : vector<8x64xf32> to vector<8xf32>
      %21 = vector.shape_cast %20 : vector<8xf32> to vector<8x1xf32>
      %cst_11 = arith.constant 6.400000e+01 : f32
      %22 = vector.broadcast %cst_11 : f32 to vector<8x1xf32>
      %23 = arith.divf %21, %22 : vector<8x1xf32>
      %24 = vector.broadcast %16 : vector<8x1xf32> to vector<8x64xf32>
      %25 = arith.subf %10, %24 : vector<8x64xf32>
      %cst_12 = arith.constant 9.99999974E-6 : f32
      %26 = vector.broadcast %cst_12 : f32 to vector<8x1xf32>
      %27 = arith.addf %23, %26 : vector<8x1xf32>
      %28 = math.rsqrt %27 : vector<8x1xf32>
      %29 = vector.broadcast %28 : vector<8x1xf32> to vector<8x64xf32>
      %30 = arith.mulf %25, %29 : vector<8x64xf32>
      %31 = vector.broadcast %11 : vector<1x64xf32> to vector<8x64xf32>
      %32 = arith.mulf %30, %31 : vector<8x64xf32>
      %33 = vector.broadcast %12 : vector<1x64xf32> to vector<8x64xf32>
      %34 = arith.addf %32, %33 : vector<8x64xf32>
      %35 = arith.truncf %34 : vector<8x64xf32> to vector<8x64xbf16>
      %c0_13 = arith.constant 0 : index
      %c0_14 = arith.constant 0 : index
      %36 = vector.load %arg7[%c0_13, %c0_14] : memref<64x192xbf16, #tpu.memory_space<vmem>>, vector<64x64xbf16>
      %cst_15 = arith.constant dense<0.000000e+00> : vector<8x64xf32>
      %37 = tpu.matmul %35, %36, %cst_15 {dimension_numbers = #tpu.dot_dimension_numbers<[1], [0], [0], [1], [0, 0, 1, 1], [], []>} : vector<8x64xbf16>, vector<64x64xbf16>, vector<8x64xf32> -> vector<8x64xf32>
      %c0_16 = arith.constant 0 : index
      %c0_17 = arith.constant 0 : index
      %38 = vector.load %arg8[%c0_16, %c0_17] : memref<1x192xf32, #tpu.memory_space<vmem>>, vector<1x64xf32>
      %39 = vector.broadcast %38 : vector<1x64xf32> to vector<8x64xf32>
      %40 = arith.addf %37, %39 : vector<8x64xf32>
      %cst_18 = arith.constant 2.500000e-01 : f32
      %41 = vector.broadcast %cst_18 : f32 to vector<8x64xf32>
      %42 = arith.mulf %40, %41 : vector<8x64xf32>
      %43 = vector.extract_strided_slice %42 {offsets = [0, 0], sizes = [8, 16], strides = [1, 1]} : vector<8x64xf32> to vector<8x16xf32>
      %44 = vector.extract_strided_slice %42 {offsets = [0, 16], sizes = [8, 16], strides = [1, 1]} : vector<8x64xf32> to vector<8x16xf32>
      %45 = vector.extract_strided_slice %42 {offsets = [0, 32], sizes = [8, 16], strides = [1, 1]} : vector<8x64xf32> to vector<8x16xf32>
      %46 = vector.extract_strided_slice %42 {offsets = [0, 48], sizes = [8, 16], strides = [1, 1]} : vector<8x64xf32> to vector<8x16xf32>
      %47 = vector.shape_cast %43 : vector<8x16xf32> to vector<1x8x16xf32>
      %48 = vector.shape_cast %44 : vector<8x16xf32> to vector<1x8x16xf32>
      %49 = vector.shape_cast %45 : vector<8x16xf32> to vector<1x8x16xf32>
      %50 = vector.shape_cast %46 : vector<8x16xf32> to vector<1x8x16xf32>
      %51 = tpu.concatenate %47, %48, %49, %50 in 0 : vector<1x8x16xf32>, vector<1x8x16xf32>, vector<1x8x16xf32>, vector<1x8x16xf32> -> vector<4x8x16xf32>
      %52 = arith.truncf %51 : vector<4x8x16xf32> to vector<4x8x16xbf16>
      %c0_19 = arith.constant 0 : index
      %c0_20 = arith.constant 0 : index
      %c0_21 = arith.constant 0 : index
      %53 = vector.load %arg12[%c0_19, %c0_20, %c0_21] : memref<4x8x16xbf16, #tpu.memory_space<vmem>>, vector<4x8x16xbf16>
      tpu.vector_store %arg12[%c0_19, %c0_20, %c0_21], %52 {strides = array<i32>} : memref<4x8x16xbf16, #tpu.memory_space<vmem>>, vector<4x8x16xbf16>,
      %cst_22 = arith.constant 0xFF800000 : f32
      %54 = vector.broadcast %cst_22 : f32 to vector<4x8x1xf32>
      %c0_23 = arith.constant 0 : index
      %c0_24 = arith.constant 0 : index
      %c0_25 = arith.constant 0 : index
      %55 = vector.load %arg13[%c0_23, %c0_24, %c0_25] : memref<4x8x1xf32, #tpu.memory_space<vmem>>, vector<4x8x1xf32>
      tpu.vector_store %arg13[%c0_23, %c0_24, %c0_25], %54 {strides = array<i32>} : memref<4x8x1xf32, #tpu.memory_space<vmem>>, vector<4x8x1xf32>,
      %cst_26 = arith.constant 0.000000e+00 : f32
      %56 = vector.broadcast %cst_26 : f32 to vector<4x8x1xf32>
      %c0_27 = arith.constant 0 : index
      %c0_28 = arith.constant 0 : index
      %c0_29 = arith.constant 0 : index
      %57 = vector.load %arg14[%c0_27, %c0_28, %c0_29] : memref<4x8x1xf32, #tpu.memory_space<vmem>>, vector<4x8x1xf32>
      tpu.vector_store %arg14[%c0_27, %c0_28, %c0_29], %56 {strides = array<i32>} : memref<4x8x1xf32, #tpu.memory_space<vmem>>, vector<4x8x1xf32>,
      %cst_30 = arith.constant 0.000000e+00 : f32
      %58 = vector.broadcast %cst_30 : f32 to vector<4x8x16xf32>
      %c0_31 = arith.constant 0 : index
      %c0_32 = arith.constant 0 : index
      %c0_33 = arith.constant 0 : index
      %59 = vector.load %arg15[%c0_31, %c0_32, %c0_33] : memref<4x8x16xf32, #tpu.memory_space<vmem>>, vector<4x8x16xf32>
      tpu.vector_store %arg15[%c0_31, %c0_32, %c0_33], %58 {strides = array<i32>} : memref<4x8x16xf32, #tpu.memory_space<vmem>>, vector<4x8x16xf32>,
    } else {
    }
    %3 = arith.cmpi sle, %arg2, %arg1 : i32
    %4 = arith.extui %3 : i1 to i32
    %c0_i32_1 = arith.constant 0 : i32
    %5 = arith.cmpi ne, %4, %c0_i32_1 : i32
    scf.if %5 {
      %c0 = arith.constant 0 : index
      %c0_3 = arith.constant 0 : index
      %c0_4 = arith.constant 0 : index
      %9 = vector.load %arg4[%c0, %c0_3, %c0_4] : memref<1x8x64xf32, #tpu.memory_space<vmem>>, vector<1x8x64xf32>
      %10 = vector.shape_cast %9 : vector<1x8x64xf32> to vector<8x64xf32>
      %c0_5 = arith.constant 0 : index
      %c0_6 = arith.constant 0 : index
      %11 = vector.load %arg5[%c0_5, %c0_6] : memref<1x64xf32, #tpu.memory_space<vmem>>, vector<1x64xf32>
      %c0_7 = arith.constant 0 : index
      %c0_8 = arith.constant 0 : index
      %12 = vector.load %arg6[%c0_7, %c0_8] : memref<1x64xf32, #tpu.memory_space<vmem>>, vector<1x64xf32>
      %cst = arith.constant dense<0.000000e+00> : vector<8xf32>
      %13 = vector.multi_reduction <add>, %10, %cst [1] : vector<8x64xf32> to vector<8xf32>
      %14 = vector.shape_cast %13 : vector<8xf32> to vector<8x1xf32>
      %cst_9 = arith.constant 6.400000e+01 : f32
      %15 = vector.broadcast %cst_9 : f32 to vector<8x1xf32>
      %16 = arith.divf %14, %15 : vector<8x1xf32>
      %17 = vector.broadcast %16 : vector<8x1xf32> to vector<8x64xf32>
      %18 = arith.subf %10, %17 : vector<8x64xf32>
      %19 = arith.mulf %18, %18 : vector<8x64xf32>
      %cst_10 = arith.constant dense<0.000000e+00> : vector<8xf32>
      %20 = vector.multi_reduction <add>, %19, %cst_10 [1] : vector<8x64xf32> to vector<8xf32>
      %21 = vector.shape_cast %20 : vector<8xf32> to vector<8x1xf32>
      %cst_11 = arith.constant 6.400000e+01 : f32
      %22 = vector.broadcast %cst_11 : f32 to vector<8x1xf32>
      %23 = arith.divf %21, %22 : vector<8x1xf32>
      %24 = vector.broadcast %16 : vector<8x1xf32> to vector<8x64xf32>
      %25 = arith.subf %10, %24 : vector<8x64xf32>
      %cst_12 = arith.constant 9.99999974E-6 : f32
      %26 = vector.broadcast %cst_12 : f32 to vector<8x1xf32>
      %27 = arith.addf %23, %26 : vector<8x1xf32>
      %28 = math.rsqrt %27 : vector<8x1xf32>
      %29 = vector.broadcast %28 : vector<8x1xf32> to vector<8x64xf32>
      %30 = arith.mulf %25, %29 : vector<8x64xf32>
      %31 = vector.broadcast %11 : vector<1x64xf32> to vector<8x64xf32>
      %32 = arith.mulf %30, %31 : vector<8x64xf32>
      %33 = vector.broadcast %12 : vector<1x64xf32> to vector<8x64xf32>
      %34 = arith.addf %32, %33 : vector<8x64xf32>
      %35 = arith.truncf %34 : vector<8x64xf32> to vector<8x64xbf16>
      %c0_13 = arith.constant 0 : index
      %c64 = arith.constant 64 : index
      %36 = vector.load %arg7[%c0_13, %c64] : memref<64x192xbf16, #tpu.memory_space<vmem>>, vector<64x128xbf16>
      %cst_14 = arith.constant dense<0.000000e+00> : vector<8x128xf32>
      %37 = tpu.matmul %35, %36, %cst_14 {dimension_numbers = #tpu.dot_dimension_numbers<[1], [0], [0], [1], [0, 0, 1, 1], [], []>} : vector<8x64xbf16>, vector<64x128xbf16>, vector<8x128xf32> -> vector<8x128xf32>
      %c0_15 = arith.constant 0 : index
      %c64_16 = arith.constant 64 : index
      %38 = vector.load %arg8[%c0_15, %c64_16] : memref<1x192xf32, #tpu.memory_space<vmem>>, vector<1x128xf32>
      %39 = vector.broadcast %38 : vector<1x128xf32> to vector<8x128xf32>
      %40 = arith.addf %37, %39 : vector<8x128xf32>
      %41 = vector.extract_strided_slice %40 {offsets = [0, 0], sizes = [8, 16], strides = [1, 1]} : vector<8x128xf32> to vector<8x16xf32>
      %42 = vector.extract_strided_slice %40 {offsets = [0, 16], sizes = [8, 16], strides = [1, 1]} : vector<8x128xf32> to vector<8x16xf32>
      %43 = vector.extract_strided_slice %40 {offsets = [0, 32], sizes = [8, 16], strides = [1, 1]} : vector<8x128xf32> to vector<8x16xf32>
      %44 = vector.extract_strided_slice %40 {offsets = [0, 48], sizes = [8, 16], strides = [1, 1]} : vector<8x128xf32> to vector<8x16xf32>
      %45 = vector.shape_cast %41 : vector<8x16xf32> to vector<1x8x16xf32>
      %46 = vector.shape_cast %42 : vector<8x16xf32> to vector<1x8x16xf32>
      %47 = vector.shape_cast %43 : vector<8x16xf32> to vector<1x8x16xf32>
      %48 = vector.shape_cast %44 : vector<8x16xf32> to vector<1x8x16xf32>
      %49 = tpu.concatenate %45, %46, %47, %48 in 0 : vector<1x8x16xf32>, vector<1x8x16xf32>, vector<1x8x16xf32>, vector<1x8x16xf32> -> vector<4x8x16xf32>
      %50 = arith.truncf %49 : vector<4x8x16xf32> to vector<4x8x16xbf16>
      %51 = vector.extract_strided_slice %40 {offsets = [0, 64], sizes = [8, 16], strides = [1, 1]} : vector<8x128xf32> to vector<8x16xf32>
      %52 = vector.extract_strided_slice %40 {offsets = [0, 80], sizes = [8, 16], strides = [1, 1]} : vector<8x128xf32> to vector<8x16xf32>
      %53 = vector.extract_strided_slice %40 {offsets = [0, 96], sizes = [8, 16], strides = [1, 1]} : vector<8x128xf32> to vector<8x16xf32>
      %54 = vector.extract_strided_slice %40 {offsets = [0, 112], sizes = [8, 16], strides = [1, 1]} : vector<8x128xf32> to vector<8x16xf32>
      %55 = vector.shape_cast %51 : vector<8x16xf32> to vector<1x8x16xf32>
      %56 = vector.shape_cast %52 : vector<8x16xf32> to vector<1x8x16xf32>
      %57 = vector.shape_cast %53 : vector<8x16xf32> to vector<1x8x16xf32>
      %58 = vector.shape_cast %54 : vector<8x16xf32> to vector<1x8x16xf32>
      %59 = tpu.concatenate %55, %56, %57, %58 in 0 : vector<1x8x16xf32>, vector<1x8x16xf32>, vector<1x8x16xf32>, vector<1x8x16xf32> -> vector<4x8x16xf32>
      %60 = arith.truncf %59 : vector<4x8x16xf32> to vector<4x8x16xbf16>
      %c0_17 = arith.constant 0 : index
      %c0_18 = arith.constant 0 : index
      %c0_19 = arith.constant 0 : index
      %61 = vector.load %arg12[%c0_17, %c0_18, %c0_19] : memref<4x8x16xbf16, #tpu.memory_space<vmem>>, vector<4x8x16xbf16>
      "tpu.trace_start"() <{level = 10 : i32, message = "hqd,hkd->hqk"}> : () -> ()
      %cst_20 = arith.constant dense<0.000000e+00> : vector<4x8x8xf32>
      %62 = tpu.matmul %61, %50, %cst_20 {dimension_numbers = #tpu.dot_dimension_numbers<[2], [2], [1], [1], [0, 0, 0, 1, 1, 1], [0], [0]>} : vector<4x8x16xbf16>, vector<4x8x16xbf16>, vector<4x8x8xf32> -> vector<4x8x8xf32>
      "tpu.trace_stop"() : () -> ()
      %c8_i32 = arith.constant 8 : i32
      %63 = arith.muli %arg1, %c8_i32 : i32
      %64 = tpu.iota {dimensions = array<i32: 0>} : vector<8x8xi32>
      %65 = vector.broadcast %63 : i32 to vector<8x8xi32>
      %66 = arith.addi %65, %64 : vector<8x8xi32>
      %c8_i32_21 = arith.constant 8 : i32
      %67 = arith.muli %arg2, %c8_i32_21 : i32
      %68 = tpu.iota {dimensions = array<i32: 1>} : vector<8x8xi32>
      %69 = vector.broadcast %67 : i32 to vector<8x8xi32>
      %70 = arith.addi %69, %68 : vector<8x8xi32>
      %71 = arith.cmpi sle, %70, %66 : vector<8x8xi32>
      %72 = vector.shape_cast %71 : vector<8x8xi1> to vector<1x8x8xi1>
      %cst_22 = arith.constant -1.000000e+30 : f32
      %73 = vector.shape_cast %72 : vector<1x8x8xi1> to vector<1x8x8xi1>
      %74 = vector.broadcast %73 : vector<1x8x8xi1> to vector<4x8x8xi1>
      %75 = vector.broadcast %cst_22 : f32 to vector<4x8x8xf32>
      %76 = arith.select %74, %62, %75 : vector<4x8x8xi1>, vector<4x8x8xf32>
      %c0_23 = arith.constant 0 : index
      %c0_24 = arith.constant 0 : index
      %c0_25 = arith.constant 0 : index
      %77 = vector.load %arg13[%c0_23, %c0_24, %c0_25] : memref<4x8x1xf32, #tpu.memory_space<vmem>>, vector<4x8x1xf32>
      %cst_26 = arith.constant dense<0xFF800000> : vector<4x8xf32>
      %78 = vector.multi_reduction <maximumf>, %76, %cst_26 [2] : vector<4x8x8xf32> to vector<4x8xf32>
      %79 = vector.shape_cast %78 : vector<4x8xf32> to vector<4x8x1xf32>
      %80 = arith.maximumf %77, %79 : vector<4x8x1xf32>
      %81 = arith.subf %77, %80 : vector<4x8x1xf32>
      %82 = math.exp %81 : vector<4x8x1xf32>
      %83 = vector.broadcast %80 : vector<4x8x1xf32> to vector<4x8x8xf32>
      %84 = arith.subf %76, %83 : vector<4x8x8xf32>
      %85 = math.exp %84 : vector<4x8x8xf32>
      %c0_27 = arith.constant 0 : index
      %c0_28 = arith.constant 0 : index
      %c0_29 = arith.constant 0 : index
      %86 = vector.load %arg14[%c0_27, %c0_28, %c0_29] : memref<4x8x1xf32, #tpu.memory_space<vmem>>, vector<4x8x1xf32>
      %87 = arith.mulf %82, %86 : vector<4x8x1xf32>
      %cst_30 = arith.constant dense<0.000000e+00> : vector<4x8xf32>
      %88 = vector.multi_reduction <add>, %85, %cst_30 [2] : vector<4x8x8xf32> to vector<4x8xf32>
      %89 = vector.shape_cast %88 : vector<4x8xf32> to vector<4x8x1xf32>
      %90 = arith.addf %87, %89 : vector<4x8x1xf32>
      %c0_31 = arith.constant 0 : index
      %c0_32 = arith.constant 0 : index
      %c0_33 = arith.constant 0 : index
      %91 = vector.load %arg14[%c0_31, %c0_32, %c0_33] : memref<4x8x1xf32, #tpu.memory_space<vmem>>, vector<4x8x1xf32>
      tpu.vector_store %arg14[%c0_31, %c0_32, %c0_33], %90 {strides = array<i32>} : memref<4x8x1xf32, #tpu.memory_space<vmem>>, vector<4x8x1xf32>,
      %c0_34 = arith.constant 0 : index
      %c0_35 = arith.constant 0 : index
      %c0_36 = arith.constant 0 : index
      %92 = vector.load %arg15[%c0_34, %c0_35, %c0_36] : memref<4x8x16xf32, #tpu.memory_space<vmem>>, vector<4x8x16xf32>
      %93 = vector.broadcast %82 : vector<4x8x1xf32> to vector<4x8x16xf32>
      %94 = arith.mulf %93, %92 : vector<4x8x16xf32>
      %95 = arith.truncf %85 : vector<4x8x8xf32> to vector<4x8x8xbf16>
      "tpu.trace_start"() <{level = 10 : i32, message = "hqk,hkd->hqd"}> : () -> ()
      %cst_37 = arith.constant dense<0.000000e+00> : vector<4x8x16xf32>
      %96 = tpu.matmul %95, %60, %cst_37 {dimension_numbers = #tpu.dot_dimension_numbers<[2], [1], [1], [2], [0, 0, 0, 1, 1, 2], [0], [0]>} : vector<4x8x8xbf16>, vector<4x8x16xbf16>, vector<4x8x16xf32> -> vector<4x8x16xf32>
      "tpu.trace_stop"() : () -> ()
      %97 = arith.addf %94, %96 : vector<4x8x16xf32>
      %c0_38 = arith.constant 0 : index
      %c0_39 = arith.constant 0 : index
      %c0_40 = arith.constant 0 : index
      %98 = vector.load %arg15[%c0_38, %c0_39, %c0_40] : memref<4x8x16xf32, #tpu.memory_space<vmem>>, vector<4x8x16xf32>
      tpu.vector_store %arg15[%c0_38, %c0_39, %c0_40], %97 {strides = array<i32>} : memref<4x8x16xf32, #tpu.memory_space<vmem>>, vector<4x8x16xf32>,
      %c0_41 = arith.constant 0 : index
      %c0_42 = arith.constant 0 : index
      %c0_43 = arith.constant 0 : index
      %99 = vector.load %arg13[%c0_41, %c0_42, %c0_43] : memref<4x8x1xf32, #tpu.memory_space<vmem>>, vector<4x8x1xf32>
      tpu.vector_store %arg13[%c0_41, %c0_42, %c0_43], %80 {strides = array<i32>} : memref<4x8x1xf32, #tpu.memory_space<vmem>>, vector<4x8x1xf32>,
    } else {
    }
    %c1_i32 = arith.constant 1 : i32
    %6 = arith.cmpi eq, %arg2, %c1_i32 : i32
    %7 = arith.extui %6 : i1 to i32
    %c0_i32_2 = arith.constant 0 : i32
    %8 = arith.cmpi ne, %7, %c0_i32_2 : i32
    scf.if %8 {
      %c0 = arith.constant 0 : index
      %c0_3 = arith.constant 0 : index
      %c0_4 = arith.constant 0 : index
      %9 = vector.load %arg14[%c0, %c0_3, %c0_4] : memref<4x8x1xf32, #tpu.memory_space<vmem>>, vector<4x8x1xf32>
      %10 = tpu.reciprocal %9 {approx = true} : vector<4x8x1xf32> -> vector<4x8x1xf32>
      %c0_5 = arith.constant 0 : index
      %c0_6 = arith.constant 0 : index
      %c0_7 = arith.constant 0 : index
      %11 = vector.load %arg15[%c0_5, %c0_6, %c0_7] : memref<4x8x16xf32, #tpu.memory_space<vmem>>, vector<4x8x16xf32>
      %12 = vector.broadcast %10 : vector<4x8x1xf32> to vector<4x8x16xf32>
      %13 = arith.mulf %11, %12 : vector<4x8x16xf32>
      %14 = vector.extract_strided_slice %13 {offsets = [0, 0, 0], sizes = [1, 8, 16], strides = [1, 1, 1]} : vector<4x8x16xf32> to vector<1x8x16xf32>
      %15 = vector.shape_cast %14 : vector<1x8x16xf32> to vector<8x16xf32>
      %16 = vector.extract_strided_slice %13 {offsets = [1, 0, 0], sizes = [1, 8, 16], strides = [1, 1, 1]} : vector<4x8x16xf32> to vector<1x8x16xf32>
      %17 = vector.shape_cast %16 : vector<1x8x16xf32> to vector<8x16xf32>
      %18 = vector.extract_strided_slice %13 {offsets = [2, 0, 0], sizes = [1, 8, 16], strides = [1, 1, 1]} : vector<4x8x16xf32> to vector<1x8x16xf32>
      %19 = vector.shape_cast %18 : vector<1x8x16xf32> to vector<8x16xf32>
      %20 = vector.extract_strided_slice %13 {offsets = [3, 0, 0], sizes = [1, 8, 16], strides = [1, 1, 1]} : vector<4x8x16xf32> to vector<1x8x16xf32>
      %21 = vector.shape_cast %20 : vector<1x8x16xf32> to vector<8x16xf32>
      %22 = tpu.concatenate %15, %17, %19, %21 in 1 : vector<8x16xf32>, vector<8x16xf32>, vector<8x16xf32>, vector<8x16xf32> -> vector<8x64xf32>
      %23 = arith.truncf %22 : vector<8x64xf32> to vector<8x64xbf16>
      %c0_8 = arith.constant 0 : index
      %c0_9 = arith.constant 0 : index
      %24 = vector.load %arg9[%c0_8, %c0_9] : memref<64x64xbf16, #tpu.memory_space<vmem>>, vector<64x64xbf16>
      %cst = arith.constant dense<0.000000e+00> : vector<8x64xf32>
      %25 = tpu.matmul %23, %24, %cst {dimension_numbers = #tpu.dot_dimension_numbers<[1], [0], [0], [1], [0, 0, 1, 1], [], []>} : vector<8x64xbf16>, vector<64x64xbf16>, vector<8x64xf32> -> vector<8x64xf32>
      %c0_10 = arith.constant 0 : index
      %c0_11 = arith.constant 0 : index
      %26 = vector.load %arg10[%c0_10, %c0_11] : memref<1x64xf32, #tpu.memory_space<vmem>>, vector<1x64xf32>
      %27 = vector.broadcast %26 : vector<1x64xf32> to vector<8x64xf32>
      %28 = arith.addf %25, %27 : vector<8x64xf32>
      %c0_12 = arith.constant 0 : index
      %c0_13 = arith.constant 0 : index
      %c0_14 = arith.constant 0 : index
      %29 = vector.load %arg3[%c0_12, %c0_13, %c0_14] : memref<1x8x64xf32, #tpu.memory_space<vmem>>, vector<1x8x64xf32>
      %30 = vector.shape_cast %29 : vector<1x8x64xf32> to vector<8x64xf32>
      %31 = arith.addf %30, %28 : vector<8x64xf32>
      %c0_15 = arith.constant 0 : index
      %c0_16 = arith.constant 0 : index
      %c0_17 = arith.constant 0 : index
      %32 = vector.load %arg11[%c0_15, %c0_16, %c0_17] : memref<1x8x64xf32, #tpu.memory_space<vmem>>, vector<1x8x64xf32>
      %33 = vector.shape_cast %32 : vector<1x8x64xf32> to vector<8x64xf32>
      %34 = vector.shape_cast %31 : vector<8x64xf32> to vector<1x8x64xf32>
      tpu.vector_store %arg11[%c0_15, %c0_16, %c0_17], %34 {strides = array<i32>} : memref<1x8x64xf32, #tpu.memory_space<vmem>>, vector<1x8x64xf32>,
    } else {
    }
    return
  }
  func.func @transform_0(%arg0: i32, %arg1: i32, %arg2: i32) -> (i32, i32, i32) {
    %c0_i32 = arith.constant 0 : i32
    %c0_i32_0 = arith.constant 0 : i32
    return %arg0, %arg1, %c0_i32 : i32, i32, i32
  }
  func.func @transform_1(%arg0: i32, %arg1: i32, %arg2: i32) -> (i32, i32, i32) {
    %c0_i32 = arith.constant 0 : i32
    %c0_i32_0 = arith.constant 0 : i32
    return %arg0, %arg2, %c0_i32 : i32, i32, i32
  }
  func.func @transform_2(%arg0: i32, %arg1: i32, %arg2: i32) -> (i32, i32) {
    %c0_i32 = arith.constant 0 : i32
    %c0_i32_0 = arith.constant 0 : i32
    %c0_i32_1 = arith.constant 0 : i32
    return %c0_i32, %c0_i32_0 : i32, i32
  }
  func.func @transform_3(%arg0: i32, %arg1: i32, %arg2: i32) -> (i32, i32) {
    %c0_i32 = arith.constant 0 : i32
    %c0_i32_0 = arith.constant 0 : i32
    %c0_i32_1 = arith.constant 0 : i32
    return %c0_i32, %c0_i32_0 : i32, i32
  }
  func.func @transform_4(%arg0: i32, %arg1: i32, %arg2: i32) -> (i32, i32) {
    %c0_i32 = arith.constant 0 : i32
    %c0_i32_0 = arith.constant 0 : i32
    %c0_i32_1 = arith.constant 0 : i32
    return %c0_i32, %c0_i32_0 : i32, i32
  }
  func.func @transform_5(%arg0: i32, %arg1: i32, %arg2: i32) -> (i32, i32) {
    %c0_i32 = arith.constant 0 : i32
    %c0_i32_0 = arith.constant 0 : i32
    %c0_i32_1 = arith.constant 0 : i32
    return %c0_i32, %c0_i32_0 : i32, i32
  }
  func.func @transform_6(%arg0: i32, %arg1: i32, %arg2: i32) -> (i32, i32) {
    %c0_i32 = arith.constant 0 : i32
    %c0_i32_0 = arith.constant 0 : i32
    %c0_i32_1 = arith.constant 0 : i32
    return %c0_i32, %c0_i32_0 : i32, i32
  }
  func.func @transform_7(%arg0: i32, %arg1: i32, %arg2: i32) -> (i32, i32) {
    %c0_i32 = arith.constant 0 : i32
    %c0_i32_0 = arith.constant 0 : i32
    %c0_i32_1 = arith.constant 0 : i32
    return %c0_i32, %c0_i32_0 : i32, i32
  }
  func.func @transform_8(%arg0: i32, %arg1: i32, %arg2: i32) -> (i32, i32, i32) {
    %c0_i32 = arith.constant 0 : i32
    %c0_i32_0 = arith.constant 0 : i32
    return %arg0, %arg1, %c0_i32 : i32, i32, i32
  }
}

</mosaic_0001>

<llo_original>
// kernel: tpu_custom_call.1
$region0: #{tpu_custom_call.1}
  #allocation0 [shape = 'u32[]', space=smem, size = 0x4, offset = 0x4, fixed_abs, tag = 'smem constant byte address 0x4 - core index']
  #allocation1 [shape = 'u32[144,128]{1,0:T(1,128)}', space=vmem, size = 0x12000, scoped, tag = 'internal scratch']
  #allocation2 [shape = 'bf16[4,8,16]{2,1,0:T(8,128)(2,1)}', space=vmem, size = 0x2000, scoped, tag = 'scratch operand']
  #allocation3 [shape = 'f32[4,8,1]{2,1,0:T(8,128)}', space=vmem, size = 0x4000, scoped, tag = 'scratch operand']
  #allocation4 [shape = 'f32[4,8,1]{2,1,0:T(8,128)}', space=vmem, size = 0x4000, scoped, tag = 'scratch operand']
  #allocation5 [shape = 'f32[4,8,16]{2,1,0:T(8,128)}', space=vmem, size = 0x4000, scoped, tag = 'scratch operand']
  %s0 = inlined_call_operand.hbm [shape: f32[2,16,64], index: 0, kind: input, shape index: {}]
  %s1 = inlined_call_operand.hbm [shape: f32[2,16,64], index: 1, kind: input, shape index: {}]
  %s2 = inlined_call_operand.vmem [shape: f32[1,64], index: 2, kind: input, shape index: {}]
  %s3 = inlined_call_operand.vmem [shape: f32[1,64], index: 3, kind: input, shape index: {}]
  %s4 = inlined_call_operand.hbm [shape: bf16[64,192], index: 4, kind: input, shape index: {}]
  %s5 = inlined_call_operand.vmem [shape: f32[1,192], index: 5, kind: input, shape index: {}]
  %s6 = inlined_call_operand.hbm [shape: bf16[64,64], index: 6, kind: input, shape index: {}]
  %s7 = inlined_call_operand.vmem [shape: f32[1,64], index: 7, kind: input, shape index: {}]
  %s8 = inlined_call_operand.hbm [shape: f32[2,16,64], index: 8, kind: output, shape index: {}]
  %s9 = sld [smem:[#allocation0]]
  $region93: #{tpu_custom_call.1} parent=0
    _
  %s11 = ssub.s32 1, %s9
  %s12 = scalar_select 0, %s11, %s9
  $region1: #{tpu_custom_call.1} parent=0
    #allocation6 [shape = 'u8[8192]{0}', space=vmem, size = 0x2000, scoped, tag = 'input window, operand 0']
    #allocation7 [shape = 's32[2]{0}', space=sflag, size = 0x8, scoped, tag = 'scoped memory for tpu_custom_call.1']
    #allocation8 [shape = 's32[2]{0}', space=sflag, size = 0x8, scoped, tag = 'scoped memory for tpu_custom_call.1']
    #allocation9 [shape = 'u8[8192]{0}', space=vmem, size = 0x2000, scoped, tag = 'input window, operand 1']
    #allocation10 [shape = 's32[2]{0}', space=sflag, size = 0x8, scoped, tag = 'scoped memory for tpu_custom_call.1']
    #allocation11 [shape = 'u8[32768]{0}', space=vmem, size = 0x8000, scoped, tag = 'input window, operand 4, single buffered']
    #allocation12 [shape = 'u8[16384]{0}', space=vmem, size = 0x4000, scoped, tag = 'input window, operand 6, single buffered']
    #allocation13 [shape = 's32[1]{0}', space=sflag, size = 0x4, scoped, tag = 'scoped memory for tpu_custom_call.1']
    #allocation14 [shape = 'u8[8192]{0}', space=vmem, size = 0x2000, scoped, tag = 'output window, operand 0']
    %13 = vsyncpa [#allocation7], 0
    %s14 = scalar_lea.sflag [#allocation7], 1
    %15 = vsyncpa %s14, 0
    %16 = vsyncpa [#allocation10], 0
    %s17 = scalar_lea.sflag [#allocation10], 1
    %18 = vsyncpa %s17, 0
    %19 = vsyncpa [#allocation13], 0
    %20 = vsyncpa [#allocation8], 0
    %s21 = scalar_lea.sflag [#allocation8], 1
    %22 = vsyncpa %s21, 0
    loop: start=0, step=1, limit=10
    $region2: #{tpu_custom_call.1} parent=1 // loop_pre_header
      _
    $region3: #{tpu_custom_call.1} parent=1 // loop_header
      %s24 = sphi 0, %s28
      %p25 = scmp.ge.s32.totalorder %s24, 10
      %s31 = sphi 0, %s50
      %s32 = sphi 0, %s46
      %s33 = sphi 0, %s42
      %s34 = sphi 0, %s31
      %s35 = sphi 0, %s32
      %s36 = sphi 0, %s33
      %s37 = sphi 0, %s34
      %s38 = sphi 0, %s35
      %s39 = sphi 0, %s36
      %s55 = sphi 0, %s57
      %s58 = sphi 0, %s55
      %s59 = sphi 0, %s58
      %s75 = sphi 0, %s59
      %s83 = sphi 0, %s85
      %s86 = sphi 0, %s83
      %s87 = sphi 0, %s86
      %s103 = sphi 0, %s87
      %s107 = sphi 0, %s107
      %s109 = sphi 0, %s107
      %s110 = sphi 0, %s109
      %s124 = sphi 0, %s110
      %s128 = sphi 0, %s128
      %s130 = sphi 0, %s128
      %s131 = sphi 0, %s130
      %s145 = sphi 0, %s131
      %s149 = sphi 0, %s149
      %s151 = sphi 0, %s149
      %s152 = sphi 0, %s151
      %s166 = sphi 0, %s152
      %s170 = sphi 0, %s170
      %s172 = sphi 0, %s170
      %s173 = sphi 0, %s172
      %s187 = sphi 0, %s173
      %s191 = sphi 0, %s191
      %s193 = sphi 0, %s191
      %s194 = sphi 0, %s193
      %s208 = sphi 0, %s194
      %s212 = sphi 0, %s212
      %s214 = sphi 0, %s212
      %s215 = sphi 0, %s214
      %s229 = sphi 0, %s215
      %s237 = sphi 0, %s239
      %s240 = sphi 0, %s237
      %s241 = sphi 0, %s240
      %s257 = sphi 0, %s241
    $region4: #{tpu_custom_call.1} parent=1 // loop_header_branch
      %27 = sbr.rel (%p25) target = $region8
    $region5: #{tpu_custom_call.1} parent=1 // loop_body
      %s29 = ssub.s32 %s24, 1
      %s30 = ssub.s32 %s24, 2
      %s40 = sadd.s32 1, %s33
      %p41 = scmp.ge.s32.totalorder %s40, 2
      %s42 = scalar_select %p41, 0, %s40
      %s43 = sadd.s32 1, %s32
      %s44 = scalar_select %p41, %s43, %s32
      %p45 = scmp.ge.s32.totalorder %s44, 2
      %s46 = scalar_select %p45, 0, %s44
      %s47 = sadd.s32 1, %s31
      %s48 = scalar_select %p45, %s47, %s31
      %p49 = scmp.ge.s32.totalorder %s48, 2
      %s50 = scalar_select %p49, 0, %s48
      %s51 = ssub.s32 %s31, %s50
      %s52 = ssub.s32 %s32, %s46
      %s53 = sor.u32 %s51, %s52
      %p54 = scmp.eq.s32.totalorder %s53, 0
      %s56 = sadd.s32 %s55, 1
      %s57 = scalar_select %p54, %s55, %s56
      %p60 = pneg %p54
      %p61 = scmp.eq.s32.totalorder %s24, 7
      %p62 = por %p60, %p61
      %p63 = scmp.ne.s32.totalorder %s55, %s58
      %p64 = scmp.eq.s32.totalorder %s24, 0
      %p65 = por %p63, %p64
      %p66 = scmp.ne.s32.totalorder %s55, %s58
      %p67 = scmp.eq.s32.totalorder %s29, 7
      %p68 = por %p66, %p67
      %p69 = scmp.ne.s32.totalorder %s58, %s59
      %p70 = scmp.eq.s32.totalorder %s29, 0
      %p71 = por %p69, %p70
      %p72 = scmp.ne.s32.totalorder %s58, %s59
      %p73 = scmp.eq.s32.totalorder %s30, 7
      %p74 = por %p72, %p73
      %p76 = scmp.ne.s32.totalorder %s59, %s75
      %p77 = scmp.eq.s32.totalorder %s30, 0
      %p78 = por %p76, %p77
      %s79 = ssub.s32 %s31, %s50
      %s80 = ssub.s32 %s33, %s42
      %s81 = sor.u32 %s79, %s80
      %p82 = scmp.eq.s32.totalorder %s81, 0
      %s84 = sadd.s32 %s83, 1
      %s85 = scalar_select %p82, %s83, %s84
      %p88 = pneg %p82
      %p89 = scmp.eq.s32.totalorder %s24, 7
      %p90 = por %p88, %p89
      %p91 = scmp.ne.s32.totalorder %s83, %s86
      %p92 = scmp.eq.s32.totalorder %s24, 0
      %p93 = por %p91, %p92
      %p94 = scmp.ne.s32.totalorder %s83, %s86
      %p95 = scmp.eq.s32.totalorder %s29, 7
      %p96 = por %p94, %p95
      %p97 = scmp.ne.s32.totalorder %s86, %s87
      %p98 = scmp.eq.s32.totalorder %s29, 0
      %p99 = por %p97, %p98
      %p100 = scmp.ne.s32.totalorder %s86, %s87
      %p101 = scmp.eq.s32.totalorder %s30, 7
      %p102 = por %p100, %p101
      %p104 = scmp.ne.s32.totalorder %s87, %s103
      %p105 = scmp.eq.s32.totalorder %s30, 0
      %p106 = por %p104, %p105
      %s108 = sadd.s32 %s107, 1
      %p111 = scmp.eq.s32.totalorder %s24, 7
      %p112 = scmp.ne.s32.totalorder %s107, %s109
      %p113 = scmp.eq.s32.totalorder %s24, 0
      %p114 = por %p112, %p113
      %p115 = scmp.ne.s32.totalorder %s107, %s109
      %p116 = scmp.eq.s32.totalorder %s29, 7
      %p117 = por %p115, %p116
      %p118 = scmp.ne.s32.totalorder %s109, %s110
      %p119 = scmp.eq.s32.totalorder %s29, 0
      %p120 = por %p118, %p119
      %p121 = scmp.ne.s32.totalorder %s109, %s110
      %p122 = scmp.eq.s32.totalorder %s30, 7
      %p123 = por %p121, %p122
      %p125 = scmp.ne.s32.totalorder %s110, %s124
      %p126 = scmp.eq.s32.totalorder %s30, 0
      %p127 = por %p125, %p126
      %s129 = sadd.s32 %s128, 1
      %p132 = scmp.eq.s32.totalorder %s24, 7
      %p133 = scmp.ne.s32.totalorder %s128, %s130
      %p134 = scmp.eq.s32.totalorder %s24, 0
      %p135 = por %p133, %p134
      %p136 = scmp.ne.s32.totalorder %s128, %s130
      %p137 = scmp.eq.s32.totalorder %s29, 7
      %p138 = por %p136, %p137
      %p139 = scmp.ne.s32.totalorder %s130, %s131
      %p140 = scmp.eq.s32.totalorder %s29, 0
      %p141 = por %p139, %p140
      %p142 = scmp.ne.s32.totalorder %s130, %s131
      %p143 = scmp.eq.s32.totalorder %s30, 7
      %p144 = por %p142, %p143
      %p146 = scmp.ne.s32.totalorder %s131, %s145
      %p147 = scmp.eq.s32.totalorder %s30, 0
      %p148 = por %p146, %p147
      %s150 = sadd.s32 %s149, 1
      %p153 = scmp.eq.s32.totalorder %s24, 7
      %p154 = scmp.ne.s32.totalorder %s149, %s151
      %p155 = scmp.eq.s32.totalorder %s24, 0
      %p156 = por %p154, %p155
      %p157 = scmp.ne.s32.totalorder %s149, %s151
      %p158 = scmp.eq.s32.totalorder %s29, 7
      %p159 = por %p157, %p158
      %p160 = scmp.ne.s32.totalorder %s151, %s152
      %p161 = scmp.eq.s32.totalorder %s29, 0
      %p162 = por %p160, %p161
      %p163 = scmp.ne.s32.totalorder %s151, %s152
      %p164 = scmp.eq.s32.totalorder %s30, 7
      %p165 = por %p163, %p164
      %p167 = scmp.ne.s32.totalorder %s152, %s166
      %p168 = scmp.eq.s32.totalorder %s30, 0
      %p169 = por %p167, %p168
      %s171 = sadd.s32 %s170, 1
      %p174 = scmp.eq.s32.totalorder %s24, 7
      %p175 = scmp.ne.s32.totalorder %s170, %s172
      %p176 = scmp.eq.s32.totalorder %s24, 0
      %p177 = por %p175, %p176
      %p178 = scmp.ne.s32.totalorder %s170, %s172
      %p179 = scmp.eq.s32.totalorder %s29, 7
      %p180 = por %p178, %p179
      %p181 = scmp.ne.s32.totalorder %s172, %s173
      %p182 = scmp.eq.s32.totalorder %s29, 0
      %p183 = por %p181, %p182
      %p184 = scmp.ne.s32.totalorder %s172, %s173
      %p185 = scmp.eq.s32.totalorder %s30, 7
      %p186 = por %p184, %p185
      %p188 = scmp.ne.s32.totalorder %s173, %s187
      %p189 = scmp.eq.s32.totalorder %s30, 0
      %p190 = por %p188, %p189
      %s192 = sadd.s32 %s191, 1
      %p195 = scmp.eq.s32.totalorder %s24, 7
      %p196 = scmp.ne.s32.totalorder %s191, %s193
      %p197 = scmp.eq.s32.totalorder %s24, 0
      %p198 = por %p196, %p197
      %p199 = scmp.ne.s32.totalorder %s191, %s193
      %p200 = scmp.eq.s32.totalorder %s29, 7
      %p201 = por %p199, %p200
      %p202 = scmp.ne.s32.totalorder %s193, %s194
      %p203 = scmp.eq.s32.totalorder %s29, 0
      %p204 = por %p202, %p203
      %p205 = scmp.ne.s32.totalorder %s193, %s194
      %p206 = scmp.eq.s32.totalorder %s30, 7
      %p207 = por %p205, %p206
      %p209 = scmp.ne.s32.totalorder %s194, %s208
      %p210 = scmp.eq.s32.totalorder %s30, 0
      %p211 = por %p209, %p210
      %s213 = sadd.s32 %s212, 1
      %p216 = scmp.eq.s32.totalorder %s24, 7
      %p217 = scmp.ne.s32.totalorder %s212, %s214
      %p218 = scmp.eq.s32.totalorder %s24, 0
      %p219 = por %p217, %p218
      %p220 = scmp.ne.s32.totalorder %s212, %s214
      %p221 = scmp.eq.s32.totalorder %s29, 7
      %p222 = por %p220, %p221
      %p223 = scmp.ne.s32.totalorder %s214, %s215
      %p224 = scmp.eq.s32.totalorder %s29, 0
      %p225 = por %p223, %p224
      %p226 = scmp.ne.s32.totalorder %s214, %s215
      %p227 = scmp.eq.s32.totalorder %s30, 7
      %p228 = por %p226, %p227
      %p230 = scmp.ne.s32.totalorder %s215, %s229
      %p231 = scmp.eq.s32.totalorder %s30, 0
      %p232 = por %p230, %p231
      %s233 = ssub.s32 %s31, %s50
      %s234 = ssub.s32 %s32, %s46
      %s235 = sor.u32 %s233, %s234
      %p236 = scmp.eq.s32.totalorder %s235, 0
      %s238 = sadd.s32 %s237, 1
      %s239 = scalar_select %p236, %s237, %s238
      %p242 = pneg %p236
      %p243 = scmp.eq.s32.totalorder %s24, 7
      %p244 = por %p242, %p243
      %p245 = scmp.ne.s32.totalorder %s237, %s240
      %p246 = scmp.eq.s32.totalorder %s24, 0
      %p247 = por %p245, %p246
      %p248 = scmp.ne.s32.totalorder %s237, %s240
      %p249 = scmp.eq.s32.totalorder %s29, 7
      %p250 = por %p248, %p249
      %p251 = scmp.ne.s32.totalorder %s240, %s241
      %p252 = scmp.eq.s32.totalorder %s29, 0
      %p253 = por %p251, %p252
      %p254 = scmp.ne.s32.totalorder %s240, %s241
      %p255 = scmp.eq.s32.totalorder %s30, 7
      %p256 = por %p254, %p255
      %p258 = scmp.ne.s32.totalorder %s241, %s257
      %p259 = scmp.eq.s32.totalorder %s30, 0
      %p260 = por %p258, %p259
      %p261 = scmp.le.s32.totalorder 1, %s24
      %p262 = scmp.lt.s32.totalorder %s24, 9
      %p263 = pnand %p261, %p262
      %p264 = pneg %p263
      // Predicated region
      $region9: #{tpu_custom_call.1} parent=5 // pred_check
        _
      $region10: #{tpu_custom_call.1} parent=5 // pred_check_branch
        %266 = sbr.rel (%p263) target = $region12
      $region11: #{tpu_custom_call.1} parent=5 // pred_region
        %s267 = ssub.s32 %s24, 1
        // Predicated region
        $region13: #{tpu_custom_call.1} parent=11 // pred_check
          %p268 = pneg %p120
        $region14: #{tpu_custom_call.1} parent=11 // pred_check_branch
          %270 = sbr.rel (%p268) target = $region16
        $region15: #{tpu_custom_call.1} parent=11 // pred_region
          _
        $region16: #{tpu_custom_call.1} parent=11 // pred_fallthru
          _
        // Predicated region
        $region17: #{tpu_custom_call.1} parent=11 // pred_check
          %p271 = pneg %p141
        $region18: #{tpu_custom_call.1} parent=11 // pred_check_branch
          %273 = sbr.rel (%p271) target = $region20
        $region19: #{tpu_custom_call.1} parent=11 // pred_region
          _
        $region20: #{tpu_custom_call.1} parent=11 // pred_fallthru
          _
        // Predicated region
        $region21: #{tpu_custom_call.1} parent=11 // pred_check
          %p274 = pneg %p162
        $region22: #{tpu_custom_call.1} parent=11 // pred_check_branch
          %276 = sbr.rel (%p274) target = $region24
        $region23: #{tpu_custom_call.1} parent=11 // pred_region
          %s278 = ssub.s32 1024, 1024
          %279 = vsyncadd [#allocation10], %s278
          %s280 = sshll.u32 [#allocation11], 4
          %s281 = int_to_ptr.vmem [resolvable:$true] %s280
          %286 = dma.hbm_to_vmem [thread:$0]  %s4, 1024, %s281, [#allocation10], 128, 128, 8
        $region24: #{tpu_custom_call.1} parent=11 // pred_fallthru
          _
        // Predicated region
        $region25: #{tpu_custom_call.1} parent=11 // pred_check
          %p287 = pneg %p183
        $region26: #{tpu_custom_call.1} parent=11 // pred_check_branch
          %289 = sbr.rel (%p287) target = $region28
        $region27: #{tpu_custom_call.1} parent=11 // pred_region
          _
        $region28: #{tpu_custom_call.1} parent=11 // pred_fallthru
          _
        // Predicated region
        $region29: #{tpu_custom_call.1} parent=11 // pred_check
          %p290 = pneg %p204
        $region30: #{tpu_custom_call.1} parent=11 // pred_check_branch
          %292 = sbr.rel (%p290) target = $region32
        $region31: #{tpu_custom_call.1} parent=11 // pred_region
          %s294 = ssub.s32 512, 512
          %295 = vsyncadd [#allocation13], %s294
          %s296 = sshll.u32 [#allocation12], 4
          %s297 = int_to_ptr.vmem [resolvable:$true] %s296
          %302 = dma.hbm_to_vmem [thread:$0]  %s6, 512, %s297, [#allocation13], 64, 64, 4
        $region32: #{tpu_custom_call.1} parent=11 // pred_fallthru
          _
        // Predicated region
        $region33: #{tpu_custom_call.1} parent=11 // pred_check
          %p303 = pneg %p225
        $region34: #{tpu_custom_call.1} parent=11 // pred_check_branch
          %305 = sbr.rel (%p303) target = $region36
        $region35: #{tpu_custom_call.1} parent=11 // pred_region
          _
        $region36: #{tpu_custom_call.1} parent=11 // pred_fallthru
          _
      $region12: #{tpu_custom_call.1} parent=5 // pred_fallthru
        _
      %p306 = scmp.lt.s32.totalorder %s24, 8
      // Predicated region
      $region37: #{tpu_custom_call.1} parent=5 // pred_check
        %p307 = pneg %p306
      $region38: #{tpu_custom_call.1} parent=5 // pred_check_branch
        %309 = sbr.rel (%p307) target = $region40
      $region39: #{tpu_custom_call.1} parent=5 // pred_region
        // Predicated region
        $region41: #{tpu_custom_call.1} parent=39 // pred_check
          %p310 = pneg %p65
        $region42: #{tpu_custom_call.1} parent=39 // pred_check_branch
          %312 = sbr.rel (%p310) target = $region44
        $region43: #{tpu_custom_call.1} parent=39 // pred_region
          %s313 = sand.u32 %s55, 1
          %s314 = scalar_lea.sflag [#allocation7], %s313
          %s315 = sand.u32 %s55, 1
          %s316 = smul.addr %s315, 8
          %s317 = scalar_lea.vmem [#allocation6], %s316
          %s319 = ssub.s32 128, 128
          %320 = vsyncadd %s314, %s319
          %s321 = smul.addr %s31, 2
          %s322 = sadd.s32 %s32, %s321
          %s323 = smul.addr %s322, 128
          %s324 = scalar_lea.hbm %s0, %s323
          %s326 = sshll.u32 %s317, 4
          %s327 = int_to_ptr.vmem [resolvable:$true] %s326
          %329 = dma.hbm_to_vmem [thread:$0]  %s324, 128, %s327, %s314
        $region44: #{tpu_custom_call.1} parent=39 // pred_fallthru
          _
        // Predicated region
        $region45: #{tpu_custom_call.1} parent=39 // pred_check
          %p330 = pneg %p93
        $region46: #{tpu_custom_call.1} parent=39 // pred_check_branch
          %332 = sbr.rel (%p330) target = $region48
        $region47: #{tpu_custom_call.1} parent=39 // pred_region
          %s333 = sand.u32 %s24, 1
          %s334 = scalar_lea.sflag [#allocation10], %s333
          %s335 = sand.u32 %s83, 1
          %s336 = smul.addr %s335, 8
          %s337 = scalar_lea.vmem [#allocation9], %s336
          %s339 = ssub.s32 128, 128
          %340 = vsyncadd %s334, %s339
          %s341 = smul.addr %s31, 2
          %s342 = sadd.s32 %s33, %s341
          %s343 = smul.addr %s342, 128
          %s344 = scalar_lea.hbm %s1, %s343
          %s346 = sshll.u32 %s337, 4
          %s347 = int_to_ptr.vmem [resolvable:$true] %s346
          %349 = dma.hbm_to_vmem [thread:$0]  %s344, 128, %s347, %s334
        $region48: #{tpu_custom_call.1} parent=39 // pred_fallthru
          _
      $region40: #{tpu_custom_call.1} parent=5 // pred_fallthru
        _
      %p350 = scmp.le.s32.totalorder 1, %s24
      %p351 = scmp.lt.s32.totalorder %s24, 9
      %p352 = pnand %p350, %p351
      %p353 = pneg %p352
      // Predicated region
      $region49: #{tpu_custom_call.1} parent=5 // pred_check
        _
      $region50: #{tpu_custom_call.1} parent=5 // pred_check_branch
        %355 = sbr.rel (%p352) target = $region52
      $region51: #{tpu_custom_call.1} parent=5 // pred_region
        %s356 = ssub.s32 %s24, 1
        %s357 = sand.u32 %s58, 1
        %s358 = scalar_lea.sflag [#allocation7], %s357
        %s359 = sand.u32 %s58, 1
        %s360 = smul.addr %s359, 8
        %s361 = scalar_lea.vmem [#allocation6], %s360
        // Predicated region
        $region53: #{tpu_custom_call.1} parent=51 // pred_check
          %p362 = pneg %p71
        $region54: #{tpu_custom_call.1} parent=51 // pred_check_branch
          %364 = sbr.rel (%p362) target = $region56
        $region55: #{tpu_custom_call.1} parent=51 // pred_region
          %365 = dma.done %s358, 128
        $region56: #{tpu_custom_call.1} parent=51 // pred_fallthru
          _
        %s366 = sand.u32 %s29, 1
        %s367 = scalar_lea.sflag [#allocation10], %s366
        %s368 = sand.u32 %s86, 1
        %s369 = smul.addr %s368, 8
        %s370 = scalar_lea.vmem [#allocation9], %s369
        // Predicated region
        $region57: #{tpu_custom_call.1} parent=51 // pred_check
          %p371 = pneg %p99
        $region58: #{tpu_custom_call.1} parent=51 // pred_check_branch
          %373 = sbr.rel (%p371) target = $region60
        $region59: #{tpu_custom_call.1} parent=51 // pred_region
          %374 = dma.done %s367, 128
        $region60: #{tpu_custom_call.1} parent=51 // pred_fallthru
          _
        // Predicated region
        $region61: #{tpu_custom_call.1} parent=51 // pred_check
          %p375 = pneg %p162
        $region62: #{tpu_custom_call.1} parent=51 // pred_check_branch
          %377 = sbr.rel (%p375) target = $region64
        $region63: #{tpu_custom_call.1} parent=51 // pred_region
          %378 = dma.done [#allocation10], 1024
        $region64: #{tpu_custom_call.1} parent=51 // pred_fallthru
          _
        // Predicated region
        $region65: #{tpu_custom_call.1} parent=51 // pred_check
          %p379 = pneg %p204
        $region66: #{tpu_custom_call.1} parent=51 // pred_check_branch
          %381 = sbr.rel (%p379) target = $region68
        $region67: #{tpu_custom_call.1} parent=51 // pred_region
          %382 = dma.done [#allocation13], 512
        $region68: #{tpu_custom_call.1} parent=51 // pred_fallthru
          _
        %s383 = sand.u32 %s58, 1
        %s384 = scalar_lea.sflag [#allocation7], %s383
        %s385 = sand.u32 %s58, 1
        %s386 = smul.addr %s385, 8
        %s387 = scalar_lea.vmem [#allocation6], %s386
        %p388 = pneg %p71
        %p389 = pneg %p68
        %s390 = sand.u32 %s29, 1
        %s391 = scalar_lea.sflag [#allocation10], %s390
        %s392 = sand.u32 %s86, 1
        %s393 = smul.addr %s392, 8
        %s394 = scalar_lea.vmem [#allocation9], %s393
        %p395 = pneg %p99
        %p396 = pneg %p96
        %p397 = pneg %p120
        %p398 = pneg %p117
        %p399 = pneg %p141
        %p400 = pneg %p138
        %p401 = pneg %p162
        %p402 = pneg %p159
        %p403 = pneg %p183
        %p404 = pneg %p180
        %p405 = pneg %p204
        %p406 = pneg %p201
        %p407 = pneg %p225
        %p408 = pneg %p222
        %p409 = pneg %p253
        %p410 = pneg %p250
        %s411 = sand.u32 %s240, 1
        %s412 = scalar_lea.sflag [#allocation8], %s411
        %s413 = sand.u32 %s240, 1
        %s414 = smul.addr %s413, 8
        %s415 = scalar_lea.vmem [#allocation14], %s414
        %p417 = scmp.eq.s32.totalorder %s36, 0
        // Predicated region
        $region69: #{tpu_custom_call.1} parent=51 // pred_check
          %p418 = pneg %p417
        $region70: #{tpu_custom_call.1} parent=51 // pred_check_branch
          %420 = sbr.rel (%p418) target = $region72
        $region71: #{tpu_custom_call.1} parent=51 // pred_region
          %v421 = vld [vmem:[%s361] sm:$0xff]
          %v422 = vld [vmem:[%s2] sm:$0x1]
          %v423 = vld [vmem:[%s3] sm:$0x1]
          %vm424 = vcmask 523264
          %v425 = vsel %vm424, %v421, 0.0
          %426 = vadd.xlane.f32.xlu0 %v425
          %v427 = vpop.xlane.xlu0 %426
          %v428 = vrcp.pop 64.0
          %v429 = vmul.f32 %v427, %v428
          %v430 = vsub.f32 %v421, %v429
          %v431 = vmul.f32 %v430, %v430
          %v432 = vsel %vm424, %v431, 0.0
          %433 = vadd.xlane.f32.xlu0 %v432
          %v434 = vpop.xlane.xlu0 %433
          %v435 = vmul.f32 %v434, %v428
          %v436 = vadd.f32 %v435, 1e-05
          %v437 = vrsqrt.pop %v436
          %v438 = vmul.f32 %v430, %v437
          %v440 = vlaneseq
          %v441 = vshrl.u32 %v440, 7
          %v442 = vsub.s32 0, %v441
          %v443 = vrot.slane %v422, %v442
          %v445 = vmul.f32 %v438, %v443
          %v447 = vlaneseq
          %v448 = vshrl.u32 %v447, 7
          %v449 = vsub.s32 0, %v448
          %v450 = vrot.slane %v423, %v449
          %v452 = vadd.f32 %v445, %v450
          %v453 = vpack.c.bf16 %v452, %v452
          %v454 = vld [vmem:[#allocation11] sm:$0xf]
          %v455 = vld [vmem:[#allocation11 + $0x8] sm:$0xf]
          %v456 = vld [vmem:[#allocation11 + $0x10] sm:$0xf]
          %v457 = vld [vmem:[#allocation11 + $0x18] sm:$0xf]
          %v458 = vld [vmem:[#allocation11 + $0x20] sm:$0xf]
          %v459 = vld [vmem:[#allocation11 + $0x28] sm:$0xf]
          %v460 = vld [vmem:[#allocation11 + $0x30] sm:$0xf]
          %v461 = vld [vmem:[#allocation11 + $0x38] sm:$0xf]
          %v462 = vld [vmem:[%s5] sm:$0x1]
          %v464 = vlaneseq
          %v465 = vshrl.u32 %v464, 7
          %v466 = vsub.s32 0, %v465
          %v467 = vrot.slane %v462, %v466
          %v477 = vunpack.c.l.b16 %v454
          %v478 = vunpack.c.l.b16 %v455
          %v479 = vunpack.c.l.b16 %v456
          %v480 = vunpack.c.l.b16 %v457
          %v481 = vunpack.c.l.b16 %v458
          %v482 = vunpack.c.l.b16 %v459
          %v483 = vunpack.c.l.b16 %v460
          %v484 = vunpack.c.l.b16 %v461
          %v485 = vpack.c.b16 %v478, %v477
          %v486 = vpack.c.b16 %v480, %v479
          %v487 = vpack.c.b16 %v482, %v481
          %v488 = vpack.c.b16 %v484, %v483
          %v494 = vsel %vm424, %v453, 0
          %496 = vmatprep.subr.bf16.mxu0 0
          %497 = vmatpush1.bf16.msra.mxu0 0
          %498 = vmatprep.subr.bf16.mxu0 0
          %499 = vmatpush1.bf16.msra.mxu0 0
          %500 = vmatprep.subr.bf16.mxu0 0
          %501 = vmatpush1.bf16.msra.mxu0 0
          %502 = vmatprep.subr.bf16.mxu0 0
          %503 = vmatpush1.bf16.msra.mxu0 0
          %504 = vmatprep.subr.bf16.mxu0 0
          %505 = vmatpush1.bf16.msra.mxu0 %v488
          %506 = vmatprep.subr.bf16.mxu0 0
          %507 = vmatpush1.bf16.msra.mxu0 %v487
          %508 = vmatprep.subr.bf16.mxu0 0
          %509 = vmatpush1.bf16.msra.mxu0 %v486
          %510 = vmatprep.subr.bf16.mxu0 0
          %511 = vmatpush1.bf16.msra.mxu0 %v485
          %512 = vmatprep.subr.bf16.mxu0 0
          %513 = vmatpush2.bf16.msra.mxu0 0
          %514 = vmatprep.subr.bf16.mxu0 0
          %515 = vmatpush2.bf16.msra.mxu0 0
          %516 = vmatprep.subr.bf16.mxu0 0
          %517 = vmatpush2.bf16.msra.mxu0 0
          %518 = vmatprep.subr.bf16.mxu0 0
          %519 = vmatpush2.bf16.msra.mxu0 0
          %520 = vmatprep.subr.bf16.mxu0 0
          %521 = vmatpush2.bf16.msra.mxu0 0
          %522 = vmatprep.subr.bf16.mxu0 0
          %523 = vmatpush2.bf16.msra.mxu0 0
          %524 = vmatprep.subr.bf16.mxu0 0
          %525 = vmatpush2.bf16.msra.mxu0 0
          %526 = vmatprep.subr.bf16.mxu0 0
          %527 = vmatpush2.bf16.msra.mxu0 0
          %528 = vmatprep.mubr.bf16.mxu0 0
          %529 = vmatmul.mubr.bf16.gmra.mxu0 %v494
          %v530 = vpop.f32.mrf.mxu0
          %v531 = vadd.f32 %v467, %v530
          %v532 = vpop.f32.mrf.mxu0
          %v533 = vpop.f32.mrf.mxu0
          %v534 = vpop.f32.mrf.mxu0
          %535 = vdwg.mxu0
          %v536 = vmul.f32 %v531, 0.25
          %538 = vrot.lane.b32.xlu0 %v536, 112
          %v539 = vpop.permute.xlu0 %538
          %541 = vrot.lane.b32.xlu0 %v536, 96
          %v542 = vpop.permute.xlu0 %541
          %544 = vrot.lane.b32.xlu0 %v536, 80
          %v545 = vpop.permute.xlu0 %544
          %v547 = vpack.c.bf16 %v536, %v536
          %v548 = vpack.c.bf16 %v539, %v539
          %v549 = vpack.c.bf16 %v542, %v542
          %v550 = vpack.c.bf16 %v545, %v545
          %vm551 = vcmask 125952
          %552 = vst.msk [vmem:[#allocation2] sm:$0xf] %vm551, %v547
          %553 = vst.msk [vmem:[#allocation2 + $0x4] sm:$0xf] %vm551, %v548
          %554 = vst.msk [vmem:[#allocation2 + $0x8] sm:$0xf] %vm551, %v549
          %555 = vst.msk [vmem:[#allocation2 + $0xc] sm:$0xf] %vm551, %v550
          %vm556 = vcmask 7168
          %557 = vst.msk [vmem:[#allocation3] sm:$0xff] %vm556, -inf
          %558 = vst.msk [vmem:[#allocation3 + $0x8] sm:$0xff] %vm556, -inf
          %559 = vst.msk [vmem:[#allocation3 + $0x10] sm:$0xff] %vm556, -inf
          %560 = vst.msk [vmem:[#allocation3 + $0x18] sm:$0xff] %vm556, -inf
          %561 = vst.msk [vmem:[#allocation4] sm:$0xff] %vm556, 0.0
          %562 = vst.msk [vmem:[#allocation4 + $0x8] sm:$0xff] %vm556, 0.0
          %563 = vst.msk [vmem:[#allocation4 + $0x10] sm:$0xff] %vm556, 0.0
          %564 = vst.msk [vmem:[#allocation4 + $0x18] sm:$0xff] %vm556, 0.0
          %vm565 = vcmask 130048
          %566 = vst.msk [vmem:[#allocation5] sm:$0xff] %vm565, 0.0
          %567 = vst.msk [vmem:[#allocation5 + $0x8] sm:$0xff] %vm565, 0.0
          %568 = vst.msk [vmem:[#allocation5 + $0x10] sm:$0xff] %vm565, 0.0
          %569 = vst.msk [vmem:[#allocation5 + $0x18] sm:$0xff] %vm565, 0.0
        $region72: #{tpu_custom_call.1} parent=51 // pred_fallthru
          _
        %p570 = scmp.le.s32.totalorder %s36, %s35
        // Predicated region
        $region73: #{tpu_custom_call.1} parent=51 // pred_check
          %p571 = pneg %p570
        $region74: #{tpu_custom_call.1} parent=51 // pred_check_branch
          %573 = sbr.rel (%p571) target = $region76
        $region75: #{tpu_custom_call.1} parent=51 // pred_region
          %v574 = vld [vmem:[%s370] sm:$0xff]
          %v575 = vld [vmem:[%s2] sm:$0x1]
          %v576 = vld [vmem:[%s3] sm:$0x1]
          %vm577 = vcmask 523264
          %v578 = vsel %vm577, %v574, 0.0
          %579 = vadd.xlane.f32.xlu0 %v578
          %v580 = vpop.xlane.xlu0 %579
          %v581 = vrcp.pop 64.0
          %v582 = vmul.f32 %v580, %v581
          %v583 = vsub.f32 %v574, %v582
          %v584 = vmul.f32 %v583, %v583
          %v585 = vsel %vm577, %v584, 0.0
          %586 = vadd.xlane.f32.xlu0 %v585
          %v587 = vpop.xlane.xlu0 %586
          %v588 = vmul.f32 %v587, %v581
          %v589 = vadd.f32 %v588, 1e-05
          %v590 = vrsqrt.pop %v589
          %v591 = vmul.f32 %v583, %v590
          %v593 = vlaneseq
          %v594 = vshrl.u32 %v593, 7
          %v595 = vsub.s32 0, %v594
          %v596 = vrot.slane %v575, %v595
          %v598 = vmul.f32 %v591, %v596
          %v600 = vlaneseq
          %v601 = vshrl.u32 %v600, 7
          %v602 = vsub.s32 0, %v601
          %v603 = vrot.slane %v576, %v602
          %v605 = vadd.f32 %v598, %v603
          %v606 = vpack.c.bf16 %v605, %v605
          %v607 = vld [vmem:[#allocation11] sm:$0xff]
          %v608 = vld [vmem:[#allocation11 + $0x8] sm:$0xff]
          %v609 = vld [vmem:[#allocation11 + $0x10] sm:$0xff]
          %v610 = vld [vmem:[#allocation11 + $0x18] sm:$0xff]
          %v611 = vld [vmem:[#allocation11 + $0x20] sm:$0xff]
          %v612 = vld [vmem:[#allocation11 + $0x28] sm:$0xff]
          %v613 = vld [vmem:[#allocation11 + $0x30] sm:$0xff]
          %v614 = vld [vmem:[#allocation11 + $0x38] sm:$0xff]
          %v615 = vld [vmem:[%s5] sm:$0x3]
          %v617 = vlaneseq
          %v618 = vshrl.u32 %v617, 7
          %v619 = vsub.s32 0, %v618
          %v620 = vrot.slane %v615, %v619
          %v621 = vlaneseq
          %v622 = vshrl.u32 %v621, 7
          %v623 = vsub.s32 1, %v622
          %v624 = vrot.slane %v615, %v623
          %v633 = vunpack.c.l.b16 %v607
          %v634 = vunpack.c.h.b16 %v607
          %v635 = vunpack.c.l.b16 %v608
          %v636 = vunpack.c.h.b16 %v608
          %v637 = vunpack.c.l.b16 %v609
          %v638 = vunpack.c.h.b16 %v609
          %v639 = vunpack.c.l.b16 %v610
          %v640 = vunpack.c.h.b16 %v610
          %v641 = vunpack.c.l.b16 %v611
          %v642 = vunpack.c.h.b16 %v611
          %v643 = vunpack.c.l.b16 %v612
          %v644 = vunpack.c.h.b16 %v612
          %v645 = vunpack.c.l.b16 %v613
          %v646 = vunpack.c.h.b16 %v613
          %v647 = vunpack.c.l.b16 %v614
          %v648 = vunpack.c.h.b16 %v614
          %v649 = vpack.c.b16 %v635, %v633
          %v650 = vpack.c.b16 %v636, %v634
          %v651 = vpack.c.b16 %v639, %v637
          %v652 = vpack.c.b16 %v640, %v638
          %v653 = vpack.c.b16 %v643, %v641
          %v654 = vpack.c.b16 %v644, %v642
          %v655 = vpack.c.b16 %v647, %v645
          %v656 = vpack.c.b16 %v648, %v646
          %657 = vrot.lane.b32.xlu0 %v649, 64
          %v658 = vpop.permute.xlu0 %657
          %659 = vrot.lane.b32.xlu0 %v650, 64
          %v660 = vpop.permute.xlu0 %659
          %661 = vrot.lane.b32.xlu0 %v651, 64
          %v662 = vpop.permute.xlu0 %661
          %663 = vrot.lane.b32.xlu0 %v652, 64
          %v664 = vpop.permute.xlu0 %663
          %665 = vrot.lane.b32.xlu0 %v653, 64
          %v666 = vpop.permute.xlu0 %665
          %667 = vrot.lane.b32.xlu0 %v654, 64
          %v668 = vpop.permute.xlu0 %667
          %669 = vrot.lane.b32.xlu0 %v655, 64
          %v670 = vpop.permute.xlu0 %669
          %671 = vrot.lane.b32.xlu0 %v656, 64
          %v672 = vpop.permute.xlu0 %671
          %vm673 = vcmask 523264
          %v674 = vsel %vm673, %v658, %v660
          %v675 = vsel %vm673, %v662, %v664
          %v676 = vsel %vm673, %v666, %v668
          %v677 = vsel %vm673, %v670, %v672
          %682 = vrot.lane.b32.xlu0 %v620, 64
          %v683 = vpop.permute.xlu0 %682
          %684 = vrot.lane.b32.xlu0 %v624, 64
          %v685 = vpop.permute.xlu0 %684
          %v686 = vsel %vm577, %v683, %v685
          %v689 = vsel %vm577, %v606, 0
          %691 = vmatprep.subr.bf16.mxu0 0
          %692 = vmatpush1.bf16.msra.mxu0 0
          %693 = vmatprep.subr.bf16.mxu0 0
          %694 = vmatpush1.bf16.msra.mxu0 0
          %695 = vmatprep.subr.bf16.mxu0 0
          %696 = vmatpush1.bf16.msra.mxu0 0
          %697 = vmatprep.subr.bf16.mxu0 0
          %698 = vmatpush1.bf16.msra.mxu0 0
          %699 = vmatprep.subr.bf16.mxu0 0
          %700 = vmatpush1.bf16.msra.mxu0 %v677
          %701 = vmatprep.subr.bf16.mxu0 0
          %702 = vmatpush1.bf16.msra.mxu0 %v676
          %703 = vmatprep.subr.bf16.mxu0 0
          %704 = vmatpush1.bf16.msra.mxu0 %v675
          %705 = vmatprep.subr.bf16.mxu0 0
          %706 = vmatpush1.bf16.msra.mxu0 %v674
          %707 = vmatprep.subr.bf16.mxu0 0
          %708 = vmatpush2.bf16.msra.mxu0 0
          %709 = vmatprep.subr.bf16.mxu0 0
          %710 = vmatpush2.bf16.msra.mxu0 0
          %711 = vmatprep.subr.bf16.mxu0 0
          %712 = vmatpush2.bf16.msra.mxu0 0
          %713 = vmatprep.subr.bf16.mxu0 0
          %714 = vmatpush2.bf16.msra.mxu0 0
          %715 = vmatprep.subr.bf16.mxu0 0
          %716 = vmatpush2.bf16.msra.mxu0 0
          %717 = vmatprep.subr.bf16.mxu0 0
          %718 = vmatpush2.bf16.msra.mxu0 0
          %719 = vmatprep.subr.bf16.mxu0 0
          %720 = vmatpush2.bf16.msra.mxu0 0
          %721 = vmatprep.subr.bf16.mxu0 0
          %722 = vmatpush2.bf16.msra.mxu0 0
          %723 = vmatprep.mubr.bf16.mxu0 0
          %724 = vmatmul.mubr.bf16.gmra.mxu0 %v689
          %v725 = vpop.f32.mrf.mxu0
          %v726 = vadd.f32 %v686, %v725
          %v727 = vpop.f32.mrf.mxu0
          %v728 = vpop.f32.mrf.mxu0
          %v729 = vpop.f32.mrf.mxu0
          %730 = vdwg.mxu0
          %732 = vrot.lane.b32.xlu0 %v726, 112
          %v733 = vpop.permute.xlu0 %732
          %735 = vrot.lane.b32.xlu0 %v726, 96
          %v736 = vpop.permute.xlu0 %735
          %738 = vrot.lane.b32.xlu0 %v726, 80
          %v739 = vpop.permute.xlu0 %738
          %v741 = vpack.c.bf16 %v726, %v726
          %v742 = vpack.c.bf16 %v733, %v733
          %v743 = vpack.c.bf16 %v736, %v736
          %v744 = vpack.c.bf16 %v739, %v739
          %v745 = vld [vmem:[#allocation2] sm:$0xf]
          %v746 = vld [vmem:[#allocation2 + $0x4] sm:$0xf]
          %v747 = vld [vmem:[#allocation2 + $0x8] sm:$0xf]
          %v748 = vld [vmem:[#allocation2 + $0xc] sm:$0xf]
          %vm749 = vcmask 130048
          %v751 = vsel %vm749, %v745, 0
          %v754 = vsel %vm749, %v741, 0
          %756 = vmatprep.subr.bf16.mxu0 0
          %757 = vmatpush1.bf16.xpose.msra.mxu0 0
          %758 = vmatprep.subr.bf16.mxu0 0
          %759 = vmatpush1.bf16.xpose.msra.mxu0 0
          %760 = vmatprep.subr.bf16.mxu0 0
          %761 = vmatpush1.bf16.xpose.msra.mxu0 0
          %762 = vmatprep.subr.bf16.mxu0 0
          %763 = vmatpush1.bf16.xpose.msra.mxu0 0
          %764 = vmatprep.subr.bf16.mxu0 0
          %765 = vmatpush1.bf16.xpose.msra.mxu0 0
          %766 = vmatprep.subr.bf16.mxu0 0
          %767 = vmatpush1.bf16.xpose.msra.mxu0 0
          %768 = vmatprep.subr.bf16.mxu0 0
          %769 = vmatpush1.bf16.xpose.msra.mxu0 0
          %770 = vmatprep.subr.bf16.mxu0 0
          %771 = vmatpush1.bf16.xpose.msra.mxu0 %v754
          %772 = vmatprep.subr.bf16.mxu0 0
          %773 = vmatpush2.bf16.xpose.msra.mxu0 0
          %774 = vmatprep.subr.bf16.mxu0 0
          %775 = vmatpush2.bf16.xpose.msra.mxu0 0
          %776 = vmatprep.subr.bf16.mxu0 0
          %777 = vmatpush2.bf16.xpose.msra.mxu0 0
          %778 = vmatprep.subr.bf16.mxu0 0
          %779 = vmatpush2.bf16.xpose.msra.mxu0 0
          %780 = vmatprep.subr.bf16.mxu0 0
          %781 = vmatpush2.bf16.xpose.msra.mxu0 0
          %782 = vmatprep.subr.bf16.mxu0 0
          %783 = vmatpush2.bf16.xpose.msra.mxu0 0
          %784 = vmatprep.subr.bf16.mxu0 0
          %785 = vmatpush2.bf16.xpose.msra.mxu0 0
          %786 = vmatprep.subr.bf16.mxu0 0
          %787 = vmatpush2.bf16.xpose.msra.mxu0 0
          %788 = vmatprep.mubr.bf16.mxu0 0
          %789 = vmatmul.mubr.bf16.gmra.mxu0 %v751
          %v790 = vpop.f32.mrf.mxu0
          %v791 = vadd.f32 0.0, %v790
          %v792 = vpop.f32.mrf.mxu0
          %v793 = vpop.f32.mrf.mxu0
          %v794 = vpop.f32.mrf.mxu0
          %795 = vdwg.mxu0
          %v797 = vsel %vm749, %v746, 0
          %v800 = vsel %vm749, %v742, 0
          %802 = vmatprep.subr.bf16.mxu0 0
          %803 = vmatpush1.bf16.xpose.msra.mxu0 0
          %804 = vmatprep.subr.bf16.mxu0 0
          %805 = vmatpush1.bf16.xpose.msra.mxu0 0
          %806 = vmatprep.subr.bf16.mxu0 0
          %807 = vmatpush1.bf16.xpose.msra.mxu0 0
          %808 = vmatprep.subr.bf16.mxu0 0
          %809 = vmatpush1.bf16.xpose.msra.mxu0 0
          %810 = vmatprep.subr.bf16.mxu0 0
          %811 = vmatpush1.bf16.xpose.msra.mxu0 0
          %812 = vmatprep.subr.bf16.mxu0 0
          %813 = vmatpush1.bf16.xpose.msra.mxu0 0
          %814 = vmatprep.subr.bf16.mxu0 0
          %815 = vmatpush1.bf16.xpose.msra.mxu0 0
          %816 = vmatprep.subr.bf16.mxu0 0
          %817 = vmatpush1.bf16.xpose.msra.mxu0 %v800
          %818 = vmatprep.subr.bf16.mxu0 0
          %819 = vmatpush2.bf16.xpose.msra.mxu0 0
          %820 = vmatprep.subr.bf16.mxu0 0
          %821 = vmatpush2.bf16.xpose.msra.mxu0 0
          %822 = vmatprep.subr.bf16.mxu0 0
          %823 = vmatpush2.bf16.xpose.msra.mxu0 0
          %824 = vmatprep.subr.bf16.mxu0 0
          %825 = vmatpush2.bf16.xpose.msra.mxu0 0
          %826 = vmatprep.subr.bf16.mxu0 0
          %827 = vmatpush2.bf16.xpose.msra.mxu0 0
          %828 = vmatprep.subr.bf16.mxu0 0
          %829 = vmatpush2.bf16.xpose.msra.mxu0 0
          %830 = vmatprep.subr.bf16.mxu0 0
          %831 = vmatpush2.bf16.xpose.msra.mxu0 0
          %832 = vmatprep.subr.bf16.mxu0 0
          %833 = vmatpush2.bf16.xpose.msra.mxu0 0
          %834 = vmatprep.mubr.bf16.mxu0 0
          %835 = vmatmul.mubr.bf16.gmra.mxu0 %v797
          %v836 = vpop.f32.mrf.mxu0
          %v837 = vadd.f32 0.0, %v836
          %v838 = vpop.f32.mrf.mxu0
          %v839 = vpop.f32.mrf.mxu0
          %v840 = vpop.f32.mrf.mxu0
          %841 = vdwg.mxu0
          %v843 = vsel %vm749, %v747, 0
          %v846 = vsel %vm749, %v743, 0
          %848 = vmatprep.subr.bf16.mxu0 0
          %849 = vmatpush1.bf16.xpose.msra.mxu0 0
          %850 = vmatprep.subr.bf16.mxu0 0
          %851 = vmatpush1.bf16.xpose.msra.mxu0 0
          %852 = vmatprep.subr.bf16.mxu0 0
          %853 = vmatpush1.bf16.xpose.msra.mxu0 0
          %854 = vmatprep.subr.bf16.mxu0 0
          %855 = vmatpush1.bf16.xpose.msra.mxu0 0
          %856 = vmatprep.subr.bf16.mxu0 0
          %857 = vmatpush1.bf16.xpose.msra.mxu0 0
          %858 = vmatprep.subr.bf16.mxu0 0
          %859 = vmatpush1.bf16.xpose.msra.mxu0 0
          %860 = vmatprep.subr.bf16.mxu0 0
          %861 = vmatpush1.bf16.xpose.msra.mxu0 0
          %862 = vmatprep.subr.bf16.mxu0 0
          %863 = vmatpush1.bf16.xpose.msra.mxu0 %v846
          %864 = vmatprep.subr.bf16.mxu0 0
          %865 = vmatpush2.bf16.xpose.msra.mxu0 0
          %866 = vmatprep.subr.bf16.mxu0 0
          %867 = vmatpush2.bf16.xpose.msra.mxu0 0
          %868 = vmatprep.subr.bf16.mxu0 0
          %869 = vmatpush2.bf16.xpose.msra.mxu0 0
          %870 = vmatprep.subr.bf16.mxu0 0
          %871 = vmatpush2.bf16.xpose.msra.mxu0 0
          %872 = vmatprep.subr.bf16.mxu0 0
          %873 = vmatpush2.bf16.xpose.msra.mxu0 0
          %874 = vmatprep.subr.bf16.mxu0 0
          %875 = vmatpush2.bf16.xpose.msra.mxu0 0
          %876 = vmatprep.subr.bf16.mxu0 0
          %877 = vmatpush2.bf16.xpose.msra.mxu0 0
          %878 = vmatprep.subr.bf16.mxu0 0
          %879 = vmatpush2.bf16.xpose.msra.mxu0 0
          %880 = vmatprep.mubr.bf16.mxu0 0
          %881 = vmatmul.mubr.bf16.gmra.mxu0 %v843
          %v882 = vpop.f32.mrf.mxu0
          %v883 = vadd.f32 0.0, %v882
          %v884 = vpop.f32.mrf.mxu0
          %v885 = vpop.f32.mrf.mxu0
          %v886 = vpop.f32.mrf.mxu0
          %887 = vdwg.mxu0
          %v889 = vsel %vm749, %v748, 0
          %v892 = vsel %vm749, %v744, 0
          %894 = vmatprep.subr.bf16.mxu0 0
          %895 = vmatpush1.bf16.xpose.msra.mxu0 0
          %896 = vmatprep.subr.bf16.mxu0 0
          %897 = vmatpush1.bf16.xpose.msra.mxu0 0
          %898 = vmatprep.subr.bf16.mxu0 0
          %899 = vmatpush1.bf16.xpose.msra.mxu0 0
          %900 = vmatprep.subr.bf16.mxu0 0
          %901 = vmatpush1.bf16.xpose.msra.mxu0 0
          %902 = vmatprep.subr.bf16.mxu0 0
          %903 = vmatpush1.bf16.xpose.msra.mxu0 0
          %904 = vmatprep.subr.bf16.mxu0 0
          %905 = vmatpush1.bf16.xpose.msra.mxu0 0
          %906 = vmatprep.subr.bf16.mxu0 0
          %907 = vmatpush1.bf16.xpose.msra.mxu0 0
          %908 = vmatprep.subr.bf16.mxu0 0
          %909 = vmatpush1.bf16.xpose.msra.mxu0 %v892
          %910 = vmatprep.subr.bf16.mxu0 0
          %911 = vmatpush2.bf16.xpose.msra.mxu0 0
          %912 = vmatprep.subr.bf16.mxu0 0
          %913 = vmatpush2.bf16.xpose.msra.mxu0 0
          %914 = vmatprep.subr.bf16.mxu0 0
          %915 = vmatpush2.bf16.xpose.msra.mxu0 0
          %916 = vmatprep.subr.bf16.mxu0 0
          %917 = vmatpush2.bf16.xpose.msra.mxu0 0
          %918 = vmatprep.subr.bf16.mxu0 0
          %919 = vmatpush2.bf16.xpose.msra.mxu0 0
          %920 = vmatprep.subr.bf16.mxu0 0
          %921 = vmatpush2.bf16.xpose.msra.mxu0 0
          %922 = vmatprep.subr.bf16.mxu0 0
          %923 = vmatpush2.bf16.xpose.msra.mxu0 0
          %924 = vmatprep.subr.bf16.mxu0 0
          %925 = vmatpush2.bf16.xpose.msra.mxu0 0
          %926 = vmatprep.mubr.bf16.mxu0 0
          %927 = vmatmul.mubr.bf16.gmra.mxu0 %v889
          %v928 = vpop.f32.mrf.mxu0
          %v929 = vadd.f32 0.0, %v928
          %v930 = vpop.f32.mrf.mxu0
          %v931 = vpop.f32.mrf.mxu0
          %v932 = vpop.f32.mrf.mxu0
          %933 = vdwg.mxu0
          %s934 = smul.u32 %s35, 8
          %v935 = vlaneseq
          %v936 = vshrl.u32 %v935, 7
          %v937 = vstv %s934
          %v938 = vadd.s32 %v937, %v936
          %s939 = smul.u32 %s36, 8
          %v940 = vlaneseq
          %v941 = vand.u32 %v940, 127
          %v942 = vstv %s939
          %v943 = vadd.s32 %v942, %v941
          %vm944 = vcmp.le.s32.totalorder %v943, %v938
          %v945 = vsel %vm944, 1, 0
          %vm946 = vcmp.eq.s32.totalorder %v945, 1
          %v947 = vsel %vm946, %v791, -1e+30
          %v948 = vsel %vm946, %v837, -1e+30
          %v949 = vsel %vm946, %v883, -1e+30
          %v950 = vsel %vm946, %v929, -1e+30
          %v951 = vld [vmem:[#allocation3] sm:$0xff]
          %v952 = vld [vmem:[#allocation3 + $0x8] sm:$0xff]
          %v953 = vld [vmem:[#allocation3 + $0x10] sm:$0xff]
          %v954 = vld [vmem:[#allocation3 + $0x18] sm:$0xff]
          %vm955 = vcmask 64512
          %v956 = vsel %vm955, %v947, -inf
          %957 = vmax.xlane.f32.xlu0 %v956
          %v958 = vpop.xlane.xlu0 %957
          %v959 = vsel %vm955, %v948, -inf
          %960 = vmax.xlane.f32.xlu0 %v959
          %v961 = vpop.xlane.xlu0 %960
          %v962 = vsel %vm955, %v949, -inf
          %963 = vmax.xlane.f32.xlu0 %v962
          %v964 = vpop.xlane.xlu0 %963
          %v965 = vsel %vm955, %v950, -inf
          %966 = vmax.xlane.f32.xlu0 %v965
          %v967 = vpop.xlane.xlu0 %966
          %v968 = vmax.f32 %v951, %v958
          %v969 = vmax.f32 %v952, %v961
          %v970 = vmax.f32 %v953, %v964
          %v971 = vmax.f32 %v954, %v967
          %v972 = vsub.f32 %v951, %v968
          %v973 = vsub.f32 %v952, %v969
          %v974 = vsub.f32 %v953, %v970
          %v975 = vsub.f32 %v954, %v971
          %v976 = vmul.f32 %v972, 1.442695
          %v977 = vpow.pop %v976
          %v978 = vmul.f32 %v973, 1.442695
          %v979 = vpow.pop %v978
          %v980 = vmul.f32 %v974, 1.442695
          %v981 = vpow.pop %v980
          %v982 = vmul.f32 %v975, 1.442695
          %v983 = vpow.pop %v982
          %985 = vset.pattern.permute.xlu0 0
          %986 = vperm.xlu0 %985, %v968
          %v987 = vpop.permute.xlu0 %986
          %990 = vset.pattern.permute.xlu0 0
          %991 = vperm.xlu0 %990, %v969
          %v992 = vpop.permute.xlu0 %991
          %995 = vset.pattern.permute.xlu0 0
          %996 = vperm.xlu0 %995, %v970
          %v997 = vpop.permute.xlu0 %996
          %1000 = vset.pattern.permute.xlu0 0
          %1001 = vperm.xlu0 %1000, %v971
          %v1002 = vpop.permute.xlu0 %1001
          %v1004 = vsub.f32 %v947, %v987
          %v1005 = vsub.f32 %v948, %v992
          %v1006 = vsub.f32 %v949, %v997
          %v1007 = vsub.f32 %v950, %v1002
          %v1008 = vmul.f32 %v1004, 1.442695
          %v1009 = vpow.pop %v1008
          %v1010 = vmul.f32 %v1005, 1.442695
          %v1011 = vpow.pop %v1010
          %v1012 = vmul.f32 %v1006, 1.442695
          %v1013 = vpow.pop %v1012
          %v1014 = vmul.f32 %v1007, 1.442695
          %v1015 = vpow.pop %v1014
          %v1016 = vld [vmem:[#allocation4] sm:$0xff]
          %v1017 = vld [vmem:[#allocation4 + $0x8] sm:$0xff]
          %v1018 = vld [vmem:[#allocation4 + $0x10] sm:$0xff]
          %v1019 = vld [vmem:[#allocation4 + $0x18] sm:$0xff]
          %v1020 = vmul.f32 %v977, %v1016
          %v1021 = vmul.f32 %v979, %v1017
          %v1022 = vmul.f32 %v981, %v1018
          %v1023 = vmul.f32 %v983, %v1019
          %v1024 = vsel %vm955, %v1009, 0.0
          %1025 = vadd.xlane.f32.xlu0 %v1024
          %v1026 = vpop.xlane.xlu0 %1025
          %v1027 = vsel %vm955, %v1011, 0.0
          %1028 = vadd.xlane.f32.xlu0 %v1027
          %v1029 = vpop.xlane.xlu0 %1028
          %v1030 = vsel %vm955, %v1013, 0.0
          %1031 = vadd.xlane.f32.xlu0 %v1030
          %v1032 = vpop.xlane.xlu0 %1031
          %v1033 = vsel %vm955, %v1015, 0.0
          %1034 = vadd.xlane.f32.xlu0 %v1033
          %v1035 = vpop.xlane.xlu0 %1034
          %v1036 = vadd.f32 %v1020, %v1026
          %v1037 = vadd.f32 %v1021, %v1029
          %v1038 = vadd.f32 %v1022, %v1032
          %v1039 = vadd.f32 %v1023, %v1035
          %vm1040 = vcmask 7168
          %1041 = vst.msk [vmem:[#allocation4] sm:$0xff] %vm1040, %v1036
          %1042 = vst.msk [vmem:[#allocation4 + $0x8] sm:$0xff] %vm1040, %v1037
          %1043 = vst.msk [vmem:[#allocation4 + $0x10] sm:$0xff] %vm1040, %v1038
          %1044 = vst.msk [vmem:[#allocation4 + $0x18] sm:$0xff] %vm1040, %v1039
          %v1045 = vld [vmem:[#allocation5] sm:$0xff]
          %v1046 = vld [vmem:[#allocation5 + $0x8] sm:$0xff]
          %v1047 = vld [vmem:[#allocation5 + $0x10] sm:$0xff]
          %v1048 = vld [vmem:[#allocation5 + $0x18] sm:$0xff]
          %1050 = vset.pattern.permute.xlu0 0
          %1051 = vperm.xlu0 %1050, %v977
          %v1052 = vpop.permute.xlu0 %1051
          %1055 = vset.pattern.permute.xlu0 0
          %1056 = vperm.xlu0 %1055, %v979
          %v1057 = vpop.permute.xlu0 %1056
          %1060 = vset.pattern.permute.xlu0 0
          %1061 = vperm.xlu0 %1060, %v981
          %v1062 = vpop.permute.xlu0 %1061
          %1065 = vset.pattern.permute.xlu0 0
          %1066 = vperm.xlu0 %1065, %v983
          %v1067 = vpop.permute.xlu0 %1066
          %v1069 = vmul.f32 %v1052, %v1045
          %v1070 = vmul.f32 %v1057, %v1046
          %v1071 = vmul.f32 %v1062, %v1047
          %v1072 = vmul.f32 %v1067, %v1048
          %v1073 = vpack.c.bf16 %v1009, %v1009
          %v1074 = vpack.c.bf16 %v1011, %v1011
          %v1075 = vpack.c.bf16 %v1013, %v1013
          %v1076 = vpack.c.bf16 %v1015, %v1015
          %1078 = vrot.lane.b32.xlu0 %v741, 64
          %v1079 = vpop.permute.xlu0 %1078
          %v1081 = vsel %vm955, %v1073, 0
          %vm1083 = vcmask 1043456
          %v1085 = vsel %vm1083, %v1079, 0
          %1087 = vmatprep.subr.bf16.mxu0 0
          %1088 = vmatpush1.bf16.msra.mxu0 0
          %1089 = vmatprep.subr.bf16.mxu0 0
          %1090 = vmatpush1.bf16.msra.mxu0 0
          %1091 = vmatprep.subr.bf16.mxu0 0
          %1092 = vmatpush1.bf16.msra.mxu0 0
          %1093 = vmatprep.subr.bf16.mxu0 0
          %1094 = vmatpush1.bf16.msra.mxu0 0
          %1095 = vmatprep.subr.bf16.mxu0 0
          %1096 = vmatpush1.bf16.msra.mxu0 0
          %1097 = vmatprep.subr.bf16.mxu0 0
          %1098 = vmatpush1.bf16.msra.mxu0 0
          %1099 = vmatprep.subr.bf16.mxu0 0
          %1100 = vmatpush1.bf16.msra.mxu0 0
          %1101 = vmatprep.subr.bf16.mxu0 0
          %1102 = vmatpush1.bf16.msra.mxu0 %v1085
          %1103 = vmatprep.subr.bf16.mxu0 0
          %1104 = vmatpush2.bf16.msra.mxu0 0
          %1105 = vmatprep.subr.bf16.mxu0 0
          %1106 = vmatpush2.bf16.msra.mxu0 0
          %1107 = vmatprep.subr.bf16.mxu0 0
          %1108 = vmatpush2.bf16.msra.mxu0 0
          %1109 = vmatprep.subr.bf16.mxu0 0
          %1110 = vmatpush2.bf16.msra.mxu0 0
          %1111 = vmatprep.subr.bf16.mxu0 0
          %1112 = vmatpush2.bf16.msra.mxu0 0
          %1113 = vmatprep.subr.bf16.mxu0 0
          %1114 = vmatpush2.bf16.msra.mxu0 0
          %1115 = vmatprep.subr.bf16.mxu0 0
          %1116 = vmatpush2.bf16.msra.mxu0 0
          %1117 = vmatprep.subr.bf16.mxu0 0
          %1118 = vmatpush2.bf16.msra.mxu0 0
          %1119 = vmatprep.mubr.bf16.mxu0 0
          %1120 = vmatmul.mubr.bf16.gmra.mxu0 %v1081
          %v1121 = vpop.f32.mrf.mxu0
          %v1122 = vadd.f32 0.0, %v1121
          %v1123 = vpop.f32.mrf.mxu0
          %v1124 = vpop.f32.mrf.mxu0
          %v1125 = vpop.f32.mrf.mxu0
          %1126 = vdwg.mxu0
          %1128 = vrot.lane.b32.xlu0 %v742, 64
          %v1129 = vpop.permute.xlu0 %1128
          %v1131 = vsel %vm955, %v1074, 0
          %v1134 = vsel %vm1083, %v1129, 0
          %1136 = vmatprep.subr.bf16.mxu0 0
          %1137 = vmatpush1.bf16.msra.mxu0 0
          %1138 = vmatprep.subr.bf16.mxu0 0
          %1139 = vmatpush1.bf16.msra.mxu0 0
          %1140 = vmatprep.subr.bf16.mxu0 0
          %1141 = vmatpush1.bf16.msra.mxu0 0
          %1142 = vmatprep.subr.bf16.mxu0 0
          %1143 = vmatpush1.bf16.msra.mxu0 0
          %1144 = vmatprep.subr.bf16.mxu0 0
          %1145 = vmatpush1.bf16.msra.mxu0 0
          %1146 = vmatprep.subr.bf16.mxu0 0
          %1147 = vmatpush1.bf16.msra.mxu0 0
          %1148 = vmatprep.subr.bf16.mxu0 0
          %1149 = vmatpush1.bf16.msra.mxu0 0
          %1150 = vmatprep.subr.bf16.mxu0 0
          %1151 = vmatpush1.bf16.msra.mxu0 %v1134
          %1152 = vmatprep.subr.bf16.mxu0 0
          %1153 = vmatpush2.bf16.msra.mxu0 0
          %1154 = vmatprep.subr.bf16.mxu0 0
          %1155 = vmatpush2.bf16.msra.mxu0 0
          %1156 = vmatprep.subr.bf16.mxu0 0
          %1157 = vmatpush2.bf16.msra.mxu0 0
          %1158 = vmatprep.subr.bf16.mxu0 0
          %1159 = vmatpush2.bf16.msra.mxu0 0
          %1160 = vmatprep.subr.bf16.mxu0 0
          %1161 = vmatpush2.bf16.msra.mxu0 0
          %1162 = vmatprep.subr.bf16.mxu0 0
          %1163 = vmatpush2.bf16.msra.mxu0 0
          %1164 = vmatprep.subr.bf16.mxu0 0
          %1165 = vmatpush2.bf16.msra.mxu0 0
          %1166 = vmatprep.subr.bf16.mxu0 0
          %1167 = vmatpush2.bf16.msra.mxu0 0
          %1168 = vmatprep.mubr.bf16.mxu0 0
          %1169 = vmatmul.mubr.bf16.gmra.mxu0 %v1131
          %v1170 = vpop.f32.mrf.mxu0
          %v1171 = vadd.f32 0.0, %v1170
          %v1172 = vpop.f32.mrf.mxu0
          %v1173 = vpop.f32.mrf.mxu0
          %v1174 = vpop.f32.mrf.mxu0
          %1175 = vdwg.mxu0
          %1177 = vrot.lane.b32.xlu0 %v743, 64
          %v1178 = vpop.permute.xlu0 %1177
          %v1180 = vsel %vm955, %v1075, 0
          %v1183 = vsel %vm1083, %v1178, 0
          %1185 = vmatprep.subr.bf16.mxu0 0
          %1186 = vmatpush1.bf16.msra.mxu0 0
          %1187 = vmatprep.subr.bf16.mxu0 0
          %1188 = vmatpush1.bf16.msra.mxu0 0
          %1189 = vmatprep.subr.bf16.mxu0 0
          %1190 = vmatpush1.bf16.msra.mxu0 0
          %1191 = vmatprep.subr.bf16.mxu0 0
          %1192 = vmatpush1.bf16.msra.mxu0 0
          %1193 = vmatprep.subr.bf16.mxu0 0
          %1194 = vmatpush1.bf16.msra.mxu0 0
          %1195 = vmatprep.subr.bf16.mxu0 0
          %1196 = vmatpush1.bf16.msra.mxu0 0
          %1197 = vmatprep.subr.bf16.mxu0 0
          %1198 = vmatpush1.bf16.msra.mxu0 0
          %1199 = vmatprep.subr.bf16.mxu0 0
          %1200 = vmatpush1.bf16.msra.mxu0 %v1183
          %1201 = vmatprep.subr.bf16.mxu0 0
          %1202 = vmatpush2.bf16.msra.mxu0 0
          %1203 = vmatprep.subr.bf16.mxu0 0
          %1204 = vmatpush2.bf16.msra.mxu0 0
          %1205 = vmatprep.subr.bf16.mxu0 0
          %1206 = vmatpush2.bf16.msra.mxu0 0
          %1207 = vmatprep.subr.bf16.mxu0 0
          %1208 = vmatpush2.bf16.msra.mxu0 0
          %1209 = vmatprep.subr.bf16.mxu0 0
          %1210 = vmatpush2.bf16.msra.mxu0 0
          %1211 = vmatprep.subr.bf16.mxu0 0
          %1212 = vmatpush2.bf16.msra.mxu0 0
          %1213 = vmatprep.subr.bf16.mxu0 0
          %1214 = vmatpush2.bf16.msra.mxu0 0
          %1215 = vmatprep.subr.bf16.mxu0 0
          %1216 = vmatpush2.bf16.msra.mxu0 0
          %1217 = vmatprep.mubr.bf16.mxu0 0
          %1218 = vmatmul.mubr.bf16.gmra.mxu0 %v1180
          %v1219 = vpop.f32.mrf.mxu0
          %v1220 = vadd.f32 0.0, %v1219
          %v1221 = vpop.f32.mrf.mxu0
          %v1222 = vpop.f32.mrf.mxu0
          %v1223 = vpop.f32.mrf.mxu0
          %1224 = vdwg.mxu0
          %1226 = vrot.lane.b32.xlu0 %v744, 64
          %v1227 = vpop.permute.xlu0 %1226
          %v1229 = vsel %vm955, %v1076, 0
          %v1232 = vsel %vm1083, %v1227, 0
          %1234 = vmatprep.subr.bf16.mxu0 0
          %1235 = vmatpush1.bf16.msra.mxu0 0
          %1236 = vmatprep.subr.bf16.mxu0 0
          %1237 = vmatpush1.bf16.msra.mxu0 0
          %1238 = vmatprep.subr.bf16.mxu0 0
          %1239 = vmatpush1.bf16.msra.mxu0 0
          %1240 = vmatprep.subr.bf16.mxu0 0
          %1241 = vmatpush1.bf16.msra.mxu0 0
          %1242 = vmatprep.subr.bf16.mxu0 0
          %1243 = vmatpush1.bf16.msra.mxu0 0
          %1244 = vmatprep.subr.bf16.mxu0 0
          %1245 = vmatpush1.bf16.msra.mxu0 0
          %1246 = vmatprep.subr.bf16.mxu0 0
          %1247 = vmatpush1.bf16.msra.mxu0 0
          %1248 = vmatprep.subr.bf16.mxu0 0
          %1249 = vmatpush1.bf16.msra.mxu0 %v1232
          %1250 = vmatprep.subr.bf16.mxu0 0
          %1251 = vmatpush2.bf16.msra.mxu0 0
          %1252 = vmatprep.subr.bf16.mxu0 0
          %1253 = vmatpush2.bf16.msra.mxu0 0
          %1254 = vmatprep.subr.bf16.mxu0 0
          %1255 = vmatpush2.bf16.msra.mxu0 0
          %1256 = vmatprep.subr.bf16.mxu0 0
          %1257 = vmatpush2.bf16.msra.mxu0 0
          %1258 = vmatprep.subr.bf16.mxu0 0
          %1259 = vmatpush2.bf16.msra.mxu0 0
          %1260 = vmatprep.subr.bf16.mxu0 0
          %1261 = vmatpush2.bf16.msra.mxu0 0
          %1262 = vmatprep.subr.bf16.mxu0 0
          %1263 = vmatpush2.bf16.msra.mxu0 0
          %1264 = vmatprep.subr.bf16.mxu0 0
          %1265 = vmatpush2.bf16.msra.mxu0 0
          %1266 = vmatprep.mubr.bf16.mxu0 0
          %1267 = vmatmul.mubr.bf16.gmra.mxu0 %v1229
          %v1268 = vpop.f32.mrf.mxu0
          %v1269 = vadd.f32 0.0, %v1268
          %v1270 = vpop.f32.mrf.mxu0
          %v1271 = vpop.f32.mrf.mxu0
          %v1272 = vpop.f32.mrf.mxu0
          %1273 = vdwg.mxu0
          %v1274 = vadd.f32 %v1069, %v1122
          %v1275 = vadd.f32 %v1070, %v1171
          %v1276 = vadd.f32 %v1071, %v1220
          %v1277 = vadd.f32 %v1072, %v1269
          %1278 = vst.msk [vmem:[#allocation5] sm:$0xff] %vm749, %v1274
          %1279 = vst.msk [vmem:[#allocation5 + $0x8] sm:$0xff] %vm749, %v1275
          %1280 = vst.msk [vmem:[#allocation5 + $0x10] sm:$0xff] %vm749, %v1276
          %1281 = vst.msk [vmem:[#allocation5 + $0x18] sm:$0xff] %vm749, %v1277
          %1282 = vst.msk [vmem:[#allocation3] sm:$0xff] %vm1040, %v968
          %1283 = vst.msk [vmem:[#allocation3 + $0x8] sm:$0xff] %vm1040, %v969
          %1284 = vst.msk [vmem:[#allocation3 + $0x10] sm:$0xff] %vm1040, %v970
          %1285 = vst.msk [vmem:[#allocation3 + $0x18] sm:$0xff] %vm1040, %v971
        $region76: #{tpu_custom_call.1} parent=51 // pred_fallthru
          _
        %p1286 = scmp.eq.s32.totalorder %s36, 1
        // Predicated region
        $region77: #{tpu_custom_call.1} parent=51 // pred_check
          %p1287 = pneg %p1286
        $region78: #{tpu_custom_call.1} parent=51 // pred_check_branch
          %1289 = sbr.rel (%p1287) target = $region80
        $region79: #{tpu_custom_call.1} parent=51 // pred_region
          %v1290 = vld [vmem:[#allocation4] sm:$0xff]
          %v1291 = vld [vmem:[#allocation4 + $0x8] sm:$0xff]
          %v1292 = vld [vmem:[#allocation4 + $0x10] sm:$0xff]
          %v1293 = vld [vmem:[#allocation4 + $0x18] sm:$0xff]
          %v1294 = vrcp.pop %v1290
          %v1295 = vrcp.pop %v1291
          %v1296 = vrcp.pop %v1292
          %v1297 = vrcp.pop %v1293
          %v1298 = vld [vmem:[#allocation5] sm:$0xff]
          %v1299 = vld [vmem:[#allocation5 + $0x8] sm:$0xff]
          %v1300 = vld [vmem:[#allocation5 + $0x10] sm:$0xff]
          %v1301 = vld [vmem:[#allocation5 + $0x18] sm:$0xff]
          %1303 = vset.pattern.permute.xlu0 0
          %1304 = vperm.xlu0 %1303, %v1294
          %v1305 = vpop.permute.xlu0 %1304
          %1308 = vset.pattern.permute.xlu0 0
          %1309 = vperm.xlu0 %1308, %v1295
          %v1310 = vpop.permute.xlu0 %1309
          %1313 = vset.pattern.permute.xlu0 0
          %1314 = vperm.xlu0 %1313, %v1296
          %v1315 = vpop.permute.xlu0 %1314
          %1318 = vset.pattern.permute.xlu0 0
          %1319 = vperm.xlu0 %1318, %v1297
          %v1320 = vpop.permute.xlu0 %1319
          %v1322 = vmul.f32 %v1298, %v1305
          %v1323 = vmul.f32 %v1299, %v1310
          %v1324 = vmul.f32 %v1300, %v1315
          %v1325 = vmul.f32 %v1301, %v1320
          %1327 = vrot.lane.b32.xlu0 %v1323, 16
          %v1328 = vpop.permute.xlu0 %1327
          %1331 = vrot.lane.b32.xlu0 %v1324, 32
          %v1332 = vpop.permute.xlu0 %1331
          %1335 = vrot.lane.b32.xlu0 %v1325, 48
          %v1336 = vpop.permute.xlu0 %1335
          %vm1338 = vcmask 130048
          %v1339 = vsel %vm1338, %v1322, %v1328
          %vm1340 = vcmask 261120
          %v1341 = vsel %vm1340, %v1339, %v1332
          %vm1342 = vcmask 392192
          %v1343 = vsel %vm1342, %v1341, %v1336
          %v1344 = vpack.c.bf16 %v1343, %v1343
          %v1345 = vld [vmem:[#allocation12] sm:$0xf]
          %v1346 = vld [vmem:[#allocation12 + $0x4] sm:$0xf]
          %v1347 = vld [vmem:[#allocation12 + $0x8] sm:$0xf]
          %v1348 = vld [vmem:[#allocation12 + $0xc] sm:$0xf]
          %v1349 = vld [vmem:[#allocation12 + $0x10] sm:$0xf]
          %v1350 = vld [vmem:[#allocation12 + $0x14] sm:$0xf]
          %v1351 = vld [vmem:[#allocation12 + $0x18] sm:$0xf]
          %v1352 = vld [vmem:[#allocation12 + $0x1c] sm:$0xf]
          %v1353 = vld [vmem:[%s7] sm:$0x1]
          %v1355 = vlaneseq
          %v1356 = vshrl.u32 %v1355, 7
          %v1357 = vsub.s32 0, %v1356
          %v1358 = vrot.slane %v1353, %v1357
          %v1368 = vunpack.c.l.b16 %v1345
          %v1369 = vunpack.c.l.b16 %v1346
          %v1370 = vunpack.c.l.b16 %v1347
          %v1371 = vunpack.c.l.b16 %v1348
          %v1372 = vunpack.c.l.b16 %v1349
          %v1373 = vunpack.c.l.b16 %v1350
          %v1374 = vunpack.c.l.b16 %v1351
          %v1375 = vunpack.c.l.b16 %v1352
          %v1376 = vpack.c.b16 %v1369, %v1368
          %v1377 = vpack.c.b16 %v1371, %v1370
          %v1378 = vpack.c.b16 %v1373, %v1372
          %v1379 = vpack.c.b16 %v1375, %v1374
          %vm1384 = vcmask 523264
          %v1386 = vsel %vm1384, %v1344, 0
          %1388 = vmatprep.subr.bf16.mxu0 0
          %1389 = vmatpush1.bf16.msra.mxu0 0
          %1390 = vmatprep.subr.bf16.mxu0 0
          %1391 = vmatpush1.bf16.msra.mxu0 0
          %1392 = vmatprep.subr.bf16.mxu0 0
          %1393 = vmatpush1.bf16.msra.mxu0 0
          %1394 = vmatprep.subr.bf16.mxu0 0
          %1395 = vmatpush1.bf16.msra.mxu0 0
          %1396 = vmatprep.subr.bf16.mxu0 0
          %1397 = vmatpush1.bf16.msra.mxu0 %v1379
          %1398 = vmatprep.subr.bf16.mxu0 0
          %1399 = vmatpush1.bf16.msra.mxu0 %v1378
          %1400 = vmatprep.subr.bf16.mxu0 0
          %1401 = vmatpush1.bf16.msra.mxu0 %v1377
          %1402 = vmatprep.subr.bf16.mxu0 0
          %1403 = vmatpush1.bf16.msra.mxu0 %v1376
          %1404 = vmatprep.subr.bf16.mxu0 0
          %1405 = vmatpush2.bf16.msra.mxu0 0
          %1406 = vmatprep.subr.bf16.mxu0 0
          %1407 = vmatpush2.bf16.msra.mxu0 0
          %1408 = vmatprep.subr.bf16.mxu0 0
          %1409 = vmatpush2.bf16.msra.mxu0 0
          %1410 = vmatprep.subr.bf16.mxu0 0
          %1411 = vmatpush2.bf16.msra.mxu0 0
          %1412 = vmatprep.subr.bf16.mxu0 0
          %1413 = vmatpush2.bf16.msra.mxu0 0
          %1414 = vmatprep.subr.bf16.mxu0 0
          %1415 = vmatpush2.bf16.msra.mxu0 0
          %1416 = vmatprep.subr.bf16.mxu0 0
          %1417 = vmatpush2.bf16.msra.mxu0 0
          %1418 = vmatprep.subr.bf16.mxu0 0
          %1419 = vmatpush2.bf16.msra.mxu0 0
          %1420 = vmatprep.mubr.bf16.mxu0 0
          %1421 = vmatmul.mubr.bf16.gmra.mxu0 %v1386
          %v1422 = vpop.f32.mrf.mxu0
          %v1423 = vadd.f32 %v1358, %v1422
          %v1424 = vpop.f32.mrf.mxu0
          %v1425 = vpop.f32.mrf.mxu0
          %v1426 = vpop.f32.mrf.mxu0
          %1427 = vdwg.mxu0
          %v1428 = vld [vmem:[%s361] sm:$0xff]
          %v1429 = vadd.f32 %v1428, %v1423
          %1430 = vst.msk [vmem:[%s415] sm:$0xff] %vm1384, %v1429
        $region80: #{tpu_custom_call.1} parent=51 // pred_fallthru
          _
        %s1431 = sand.u32 %s240, 1
        %s1432 = scalar_lea.sflag [#allocation8], %s1431
        %s1433 = sand.u32 %s240, 1
        %s1434 = smul.addr %s1433, 8
        %s1435 = scalar_lea.vmem [#allocation14], %s1434
        // Predicated region
        $region81: #{tpu_custom_call.1} parent=51 // pred_check
          %p1436 = pneg %p250
        $region82: #{tpu_custom_call.1} parent=51 // pred_check_branch
          %1438 = sbr.rel (%p1436) target = $region84
        $region83: #{tpu_custom_call.1} parent=51 // pred_region
          %s1440 = ssub.s32 128, 128
          %1441 = vsyncadd %s1432, %s1440
          %s1442 = smul.addr %s34, 2
          %s1443 = sadd.s32 %s35, %s1442
          %s1444 = smul.addr %s1443, 128
          %s1445 = scalar_lea.hbm %s8, %s1444
          %s1447 = sshll.u32 %s1435, 4
          %s1448 = int_to_ptr.vmem [resolvable:$true] %s1447
          %1450 = dma.vmem_to_hbm [thread:$0]  %s1448, 128, %s1445, %s1432
        $region84: #{tpu_custom_call.1} parent=51 // pred_fallthru
          _
      $region52: #{tpu_custom_call.1} parent=5 // pred_fallthru
        _
      %p1451 = scmp.le.s32.totalorder 2, %s24
      // Predicated region
      $region85: #{tpu_custom_call.1} parent=5 // pred_check
        %p1452 = pneg %p1451
      $region86: #{tpu_custom_call.1} parent=5 // pred_check_branch
        %1454 = sbr.rel (%p1452) target = $region88
      $region87: #{tpu_custom_call.1} parent=5 // pred_region
        %s1455 = ssub.s32 %s24, 2
        // Predicated region
        $region89: #{tpu_custom_call.1} parent=87 // pred_check
          %p1456 = pneg %p256
        $region90: #{tpu_custom_call.1} parent=87 // pred_check_branch
          %1458 = sbr.rel (%p1456) target = $region92
        $region91: #{tpu_custom_call.1} parent=87 // pred_region
          %s1459 = sand.u32 %s241, 1
          %s1460 = scalar_lea.sflag [#allocation8], %s1459
          %s1461 = sand.u32 %s241, 1
          %s1462 = smul.addr %s1461, 8
          %s1463 = scalar_lea.vmem [#allocation14], %s1462
          %1464 = dma.done %s1460, 128
        $region92: #{tpu_custom_call.1} parent=87 // pred_fallthru
          _
      $region88: #{tpu_custom_call.1} parent=5 // pred_fallthru
        _
    $region6: #{tpu_custom_call.1} parent=1 // loop_footer
      %s28 = sadd.s32 1, %s24
    $region7: #{tpu_custom_call.1} parent=1 // loop_footer_branch
      %23 = sbr.rel target = $region3
    $region8: #{tpu_custom_call.1} parent=1 // loop_exit
      _
    %1465 = vsyncpa [#allocation7], 1
    %s1466 = scalar_lea.sflag [#allocation7], 1
    %1467 = vsyncpa %s1466, 1
    %1468 = vsyncpa [#allocation10], 1
    %s1469 = scalar_lea.sflag [#allocation10], 1
    %1470 = vsyncpa %s1469, 1
    %1471 = vsyncpa [#allocation13], 1
    %1472 = vsyncpa [#allocation8], 1
    %s1473 = scalar_lea.sflag [#allocation8], 1
    %1474 = vsyncpa %s1473, 1

</llo_original>
